<compile_context>
chip_gen: v5e
topology: v5e:2x2
jax: 0.10.0
libtpu: 0.0.40
codegen_flags: <defaults>
</compile_context>

<pallas_src>
import jax
import jax.numpy as jnp
from jax.experimental import pallas as pl
from jax.experimental.pallas import tpu as pltpu


# ----------------------------------------------------------------------------
# Kernel 1: GRU over a [T, B, E] sequence -> last hidden [B, H]
# ----------------------------------------------------------------------------
def _gru_seq_kernel(x_ref, wih_ref, whh_ref, bih_ref, bhh_ref, h_ref):
    """One timestep; grid = (batch_tiles, T).

    h_ref is the output block for this batch tile; its index_map is constant
    across the time axis, so it stays resident in VMEM across all T steps and
    doubles as the recurrent state.  Weight index_maps are constant, so the
    weights are DMA'd to VMEM once, not once per timestep.
    """
    @pl.when(pl.program_id(1) == 0)
    def _init():
        h_ref[...] = jnp.zeros_like(h_ref)      # PyTorch GRU zero init_hidden

    x = x_ref[0]                                # [bb, E]  f32
    h = h_ref[...]                              # [bb, H]  f32
    wih = wih_ref[...]                          # [E, 3H]  bf16 (gates r|z|n)
    whh = whh_ref[...]                          # [H, 3H]  bf16

    # Two fused gate matmuls instead of six tiny ones.
    gi = jnp.dot(x.astype(wih.dtype), wih,
                 preferred_element_type=jnp.float32) + bih_ref[...]
    gh = jnp.dot(h.astype(whh.dtype), whh,
                 preferred_element_type=jnp.float32) + bhh_ref[...]

    H = h_ref.shape[1]
    r = jax.nn.sigmoid(gi[:, 0:H] + gh[:, 0:H])
    z = jax.nn.sigmoid(gi[:, H:2 * H] + gh[:, H:2 * H])
    n = jnp.tanh(gi[:, 2 * H:3 * H] + r * gh[:, 2 * H:3 * H])
    h_ref[...] = (1.0 - z) * n + z * h


def pallas_gru_last_hidden(x_seq, gru, *, block_b=8):
    """x_seq: [T, B, E] (time-major).  Returns last hidden [B, H] (f32)."""
    T, B, E = x_seq.shape
    H = gru["whh"].shape[0]
    bb = block_b if B % block_b == 0 else B
    return pl.pallas_call(
        _gru_seq_kernel,
        out_shape=jax.ShapeDtypeStruct((B, H), jnp.float32),
        grid=(B // bb, T),
        in_specs=[
            pl.BlockSpec((1, bb, E), lambda b, t: (t, b, 0)),   # one timestep
            pl.BlockSpec((E, 3 * H), lambda b, t: (0, 0)),      # resident
            pl.BlockSpec((H, 3 * H), lambda b, t: (0, 0)),      # resident
            pl.BlockSpec((1, 3 * H), lambda b, t: (0, 0)),
            pl.BlockSpec((1, 3 * H), lambda b, t: (0, 0)),
        ],
        out_specs=pl.BlockSpec((bb, H), lambda b, t: (b, 0)),   # recurrent state
        compiler_params=pltpu.CompilerParams(
            dimension_semantics=("parallel", "arbitrary")),
    )(x_seq, gru["wih"], gru["whh"], gru["bih"], gru["bhh"])


# ----------------------------------------------------------------------------
# Kernel 2: fused v_att + attention pooling + q_net/v_net + joint product
# ----------------------------------------------------------------------------
def _att_joint_kernel(v_ref, qemb_ref, vw_ref, vb_ref, qw_ref, qb_ref, wa_ref,
                      qnw_ref, qnb_ref, vnw_ref, vnb_ref, joint_ref):
    bb, K, Dv = v_ref.shape
    H = qw_ref.shape[1]

    v = v_ref[...]                                      # [bb, K, Dv] f32
    q_emb = qemb_ref[...]                               # [bb, H]     f32

    # v_att.v_proj / q_proj  (FCNet = Linear + ReLU; weight_norm is a
    # reparametrization only -> folded into the effective weight).
    vw = vw_ref[...]
    qw = qw_ref[...]
    v2d = v.reshape(bb * K, Dv)                         # layout-free collapse
    vproj = jnp.maximum(
        jnp.dot(v2d.astype(vw.dtype), vw,
                preferred_element_type=jnp.float32) + vb_ref[...], 0.0)
    qproj = jnp.maximum(
        jnp.dot(q_emb.astype(qw.dtype), qw,
                preferred_element_type=jnp.float32) + qb_ref[...], 0.0)

    # logits[b,k] = sum_h vproj[b,k,h] * qproj[b,h] * wa[h]
    # (the 1-unit linear's bias is constant over k -> a no-op under softmax,
    #  so it is omitted here.)
    q_scaled = qproj * wa_ref[...]                      # [bb, H]
    logits = jnp.sum(vproj.reshape(bb, K, H) * q_scaled[:, None, :], axis=-1)

    # softmax over regions (dim=1) and attention-weighted pooling of v.
    m = jnp.max(logits, axis=1, keepdims=True)
    e = jnp.exp(logits - m)
    att = e / jnp.sum(e, axis=1, keepdims=True)         # [bb, K]
    v_emb = jnp.sum(att[:, :, None] * v, axis=1)        # [bb, Dv]

    # q_net / v_net (FCNet) + joint product, all fused as an epilogue.
    qnw = qnw_ref[...]
    vnw = vnw_ref[...]
    q_repr = jnp.maximum(
        jnp.dot(q_emb.astype(qnw.dtype), qnw,
                preferred_element_type=jnp.float32) + qnb_ref[...], 0.0)
    v_repr = jnp.maximum(
        jnp.dot(v_emb.astype(vnw.dtype), vnw,
                preferred_element_type=jnp.float32) + vnb_ref[...], 0.0)
    joint_ref[...] = q_repr * v_repr


def pallas_att_joint(v, q_emb, p, *, block_b=8):
    B, K, Dv = v.shape
    H = p["qnet_w"].shape[1]
    bb = block_b if B % block_b == 0 else B
    const = lambda b: (0, 0)
    return pl.pallas_call(
        _att_joint_kernel,
        out_shape=jax.ShapeDtypeStruct((B, H), jnp.float32),
        grid=(B // bb,),
        in_specs=[
            pl.BlockSpec((bb, K, Dv), lambda b: (b, 0, 0)),   # v
            pl.BlockSpec((bb, H), lambda b: (b, 0)),          # q_emb
            pl.BlockSpec((Dv, H), const),                     # att_vw
            pl.BlockSpec((1, H), const),                      # att_vb
            pl.BlockSpec((H, H), const),                      # att_qw
            pl.BlockSpec((1, H), const),                      # att_qb
            pl.BlockSpec((1, H), const),                      # att_wa
            pl.BlockSpec((H, H), const),                      # qnet_w
            pl.BlockSpec((1, H), const),                      # qnet_b
            pl.BlockSpec((Dv, H), const),                     # vnet_w
            pl.BlockSpec((1, H), const),                      # vnet_b
        ],
        out_specs=pl.BlockSpec((bb, H), lambda b: (b, 0)),
        compiler_params=pltpu.CompilerParams(
            dimension_semantics=("parallel",)),
    )(v, q_emb, p["att_vw"], p["att_vb"], p["att_qw"], p["att_qb"],
      p["att_wa"], p["qnet_w"], p["qnet_b"], p["vnet_w"], p["vnet_b"])


# ----------------------------------------------------------------------------
# Parameter initialisation (deterministic, synthetic)
# ----------------------------------------------------------------------------
def init_params(key, vocab, emb, H, Dv):
    ks = iter(jax.random.split(key, 20))
    mxu = jnp.bfloat16  # matmul weights stored bf16 (f32 accumulation in-kernel)

    def nrm(shape, dtype=jnp.float32, scale=0.1):
        return (jax.random.normal(next(ks), shape, jnp.float32) * scale).astype(dtype)

    def gru(in_dim, hid):
        # PyTorch GRU gate order (r, z, n) concatenated along the output axis.
        return dict(wih=nrm((in_dim, 3 * hid), mxu),
                    whh=nrm((hid, 3 * hid), mxu),
                    bih=nrm((1, 3 * hid)),
                    bhh=nrm((1, 3 * hid)))

    return dict(
        w_emb=nrm((vocab, emb)),                    # word embedding table
        q_gru=gru(emb, H),                          # q_emb: question GRU
        att_vw=nrm((Dv, H), mxu), att_vb=nrm((1, H)),   # v_att.v_proj (FCNet)
        att_qw=nrm((H, H), mxu), att_qb=nrm((1, H)),    # v_att.q_proj (FCNet)
        att_wa=nrm((1, H)),                         # v_att.linear -> 1 logit
        qnet_w=nrm((H, H), mxu), qnet_b=nrm((1, H)),    # q_net (FCNet)
        vnet_w=nrm((Dv, H), mxu), vnet_b=nrm((1, H)),   # v_net (FCNet)
    )


# ----------------------------------------------------------------------------
# BaseModel.forward
# ----------------------------------------------------------------------------
def base_model_forward(params, v, q):
    """v: [B, K, Dv], q: [B, Tq] int32  ->  joint_repr: [B, H]."""
    # w_emb(q): embedding gather (plain-JAX glue).
    w_emb = params["w_emb"][q]                      # [B, Tq, emb]
    x_seq = jnp.transpose(w_emb, (1, 0, 2))         # [Tq, B, emb] time-major

    # q_emb: GRU over the question, last hidden.
    q_emb = pallas_gru_last_hidden(x_seq, params["q_gru"])          # [B, H]

    # v_att + (att*v).sum(1) + q_net/v_net + q_repr*v_repr, fully fused.
    joint_repr = pallas_att_joint(v, q_emb, params)                 # [B, H]
    return joint_repr


# ----------------------------------------------------------------------------
if __name__ == "__main__":
    # Small but lane/sublane-friendly shapes (feature dims multiple of 128,
    # batch/region dims multiple of 8).
    B, K, Dv = 8, 16, 128       # batch, image regions, region feature dim
    Tq = 8                      # question length
    vocab, emb, H = 64, 128, 128

    key = jax.random.PRNGKey(0)
    kp, kv, kq = jax.random.split(key, 3)

    params = init_params(kp, vocab, emb, H, Dv)
    v = jax.random.normal(kv, (B, K, Dv), jnp.float32)
    q = jax.random.randint(kq, (B, Tq), 0, vocab, jnp.int32)

    fwd = jax.jit(base_model_forward)
    joint_repr = fwd(params, v, q)
    jax.block_until_ready(joint_repr)

    assert joint_repr.shape == (B, H), joint_repr.shape
    assert bool(jnp.all(jnp.isfinite(joint_repr)))
    print("KERNEL_OK")
</pallas_src>

<mosaic_0001>
module attributes {stable_mosaic.version = 11 : i64} {
  func.func @_att_joint_kernel(%arg0: i32, %arg1: memref<8x16x128xf32, #tpu.memory_space<vmem>>, %arg2: memref<8x128xf32, #tpu.memory_space<vmem>>, %arg3: memref<128x128xbf16, #tpu.memory_space<vmem>>, %arg4: memref<1x128xf32, #tpu.memory_space<vmem>>, %arg5: memref<128x128xbf16, #tpu.memory_space<vmem>>, %arg6: memref<1x128xf32, #tpu.memory_space<vmem>>, %arg7: memref<1x128xf32, #tpu.memory_space<vmem>>, %arg8: memref<128x128xbf16, #tpu.memory_space<vmem>>, %arg9: memref<1x128xf32, #tpu.memory_space<vmem>>, %arg10: memref<128x128xbf16, #tpu.memory_space<vmem>>, %arg11: memref<1x128xf32, #tpu.memory_space<vmem>>, %arg12: memref<8x128xf32, #tpu.memory_space<vmem>>) attributes {dimension_semantics = [#tpu.dimension_semantics<parallel>], iteration_bounds = array<i64: 1>, scalar_prefetch = 0 : i64, scratch_operands = 0 : i64, tpu.core_type = #tpu.core_type<tc>, window_params = [{transform_indices = @transform_0, window_bounds = array<i64: 8, 16, 128>}, {transform_indices = @transform_1, window_bounds = array<i64: 8, 128>}, {pipeline_mode = #tpu.pipeline_mode<synchronous>, transform_indices = @transform_2, window_bounds = array<i64: 128, 128>}, {pipeline_mode = #tpu.pipeline_mode<synchronous>, transform_indices = @transform_3, window_bounds = array<i64: 1, 128>}, {pipeline_mode = #tpu.pipeline_mode<synchronous>, transform_indices = @transform_4, window_bounds = array<i64: 128, 128>}, {pipeline_mode = #tpu.pipeline_mode<synchronous>, transform_indices = @transform_5, window_bounds = array<i64: 1, 128>}, {pipeline_mode = #tpu.pipeline_mode<synchronous>, transform_indices = @transform_6, window_bounds = array<i64: 1, 128>}, {pipeline_mode = #tpu.pipeline_mode<synchronous>, transform_indices = @transform_7, window_bounds = array<i64: 128, 128>}, {pipeline_mode = #tpu.pipeline_mode<synchronous>, transform_indices = @transform_8, window_bounds = array<i64: 1, 128>}, {pipeline_mode = #tpu.pipeline_mode<synchronous>, transform_indices = @transform_9, window_bounds = array<i64: 128, 128>}, {pipeline_mode = #tpu.pipeline_mode<synchronous>, transform_indices = @transform_10, window_bounds = array<i64: 1, 128>}, {transform_indices = @transform_11, window_bounds = array<i64: 8, 128>}]} {
    %c0 = arith.constant 0 : index
    %c0_0 = arith.constant 0 : index
    %c0_1 = arith.constant 0 : index
    %0 = vector.load %arg1[%c0, %c0_0, %c0_1] : memref<8x16x128xf32, #tpu.memory_space<vmem>>, vector<8x16x128xf32>
    %c0_2 = arith.constant 0 : index
    %c0_3 = arith.constant 0 : index
    %1 = vector.load %arg2[%c0_2, %c0_3] : memref<8x128xf32, #tpu.memory_space<vmem>>, vector<8x128xf32>
    %c0_4 = arith.constant 0 : index
    %c0_5 = arith.constant 0 : index
    %2 = vector.load %arg3[%c0_4, %c0_5] : memref<128x128xbf16, #tpu.memory_space<vmem>>, vector<128x128xbf16>
    %c0_6 = arith.constant 0 : index
    %c0_7 = arith.constant 0 : index
    %3 = vector.load %arg5[%c0_6, %c0_7] : memref<128x128xbf16, #tpu.memory_space<vmem>>, vector<128x128xbf16>
    %4 = vector.shape_cast %0 : vector<8x16x128xf32> to vector<128x128xf32>
    %5 = arith.truncf %4 : vector<128x128xf32> to vector<128x128xbf16>
    %cst = arith.constant dense<0.000000e+00> : vector<128x128xf32>
    %6 = tpu.matmul %5, %2, %cst {dimension_numbers = #tpu.dot_dimension_numbers<[1], [0], [0], [1], [0, 0, 1, 1], [], []>} : vector<128x128xbf16>, vector<128x128xbf16>, vector<128x128xf32> -> vector<128x128xf32>
    %c0_8 = arith.constant 0 : index
    %c0_9 = arith.constant 0 : index
    %7 = vector.load %arg4[%c0_8, %c0_9] : memref<1x128xf32, #tpu.memory_space<vmem>>, vector<1x128xf32>
    %8 = vector.broadcast %7 : vector<1x128xf32> to vector<128x128xf32>
    %9 = arith.addf %6, %8 : vector<128x128xf32>
    %cst_10 = arith.constant 0.000000e+00 : f32
    %10 = vector.broadcast %cst_10 : f32 to vector<128x128xf32>
    %11 = arith.maximumf %9, %10 : vector<128x128xf32>
    %12 = arith.truncf %1 : vector<8x128xf32> to vector<8x128xbf16>
    %cst_11 = arith.constant dense<0.000000e+00> : vector<8x128xf32>
    %13 = tpu.matmul %12, %3, %cst_11 {dimension_numbers = #tpu.dot_dimension_numbers<[1], [0], [0], [1], [0, 0, 1, 1], [], []>} : vector<8x128xbf16>, vector<128x128xbf16>, vector<8x128xf32> -> vector<8x128xf32>
    %c0_12 = arith.constant 0 : index
    %c0_13 = arith.constant 0 : index
    %14 = vector.load %arg6[%c0_12, %c0_13] : memref<1x128xf32, #tpu.memory_space<vmem>>, vector<1x128xf32>
    %15 = vector.broadcast %14 : vector<1x128xf32> to vector<8x128xf32>
    %16 = arith.addf %13, %15 : vector<8x128xf32>
    %cst_14 = arith.constant 0.000000e+00 : f32
    %17 = vector.broadcast %cst_14 : f32 to vector<8x128xf32>
    %18 = arith.maximumf %16, %17 : vector<8x128xf32>
    %c0_15 = arith.constant 0 : index
    %c0_16 = arith.constant 0 : index
    %19 = vector.load %arg7[%c0_15, %c0_16] : memref<1x128xf32, #tpu.memory_space<vmem>>, vector<1x128xf32>
    %20 = vector.broadcast %19 : vector<1x128xf32> to vector<8x128xf32>
    %21 = arith.mulf %18, %20 : vector<8x128xf32>
    %22 = vector.shape_cast %11 : vector<128x128xf32> to vector<8x16x128xf32>
    %23 = vector.shape_cast %21 : vector<8x128xf32> to vector<8x1x128xf32>
    %24 = vector.broadcast %23 : vector<8x1x128xf32> to vector<8x16x128xf32>
    %25 = arith.mulf %22, %24 : vector<8x16x128xf32>
    %cst_17 = arith.constant dense<0.000000e+00> : vector<8x16xf32>
    %26 = vector.multi_reduction <add>, %25, %cst_17 [2] : vector<8x16x128xf32> to vector<8x16xf32>
    %cst_18 = arith.constant dense<0xFF800000> : vector<8xf32>
    %27 = vector.multi_reduction <maximumf>, %26, %cst_18 [1] : vector<8x16xf32> to vector<8xf32>
    %28 = vector.shape_cast %27 : vector<8xf32> to vector<8x1xf32>
    %29 = vector.broadcast %28 : vector<8x1xf32> to vector<8x16xf32>
    %30 = arith.subf %26, %29 : vector<8x16xf32>
    %31 = math.exp %30 : vector<8x16xf32>
    %cst_19 = arith.constant dense<0.000000e+00> : vector<8xf32>
    %32 = vector.multi_reduction <add>, %31, %cst_19 [1] : vector<8x16xf32> to vector<8xf32>
    %33 = vector.shape_cast %32 : vector<8xf32> to vector<8x1xf32>
    %34 = vector.broadcast %33 : vector<8x1xf32> to vector<8x16xf32>
    %35 = arith.divf %31, %34 : vector<8x16xf32>
    %36 = vector.shape_cast %35 : vector<8x16xf32> to vector<8x16x1xf32>
    %37 = vector.broadcast %36 : vector<8x16x1xf32> to vector<8x16x128xf32>
    %38 = arith.mulf %37, %0 : vector<8x16x128xf32>
    %cst_20 = arith.constant dense<0.000000e+00> : vector<8x128xf32>
    %39 = vector.multi_reduction <add>, %38, %cst_20 [1] : vector<8x16x128xf32> to vector<8x128xf32>
    %c0_21 = arith.constant 0 : index
    %c0_22 = arith.constant 0 : index
    %40 = vector.load %arg8[%c0_21, %c0_22] : memref<128x128xbf16, #tpu.memory_space<vmem>>, vector<128x128xbf16>
    %c0_23 = arith.constant 0 : index
    %c0_24 = arith.constant 0 : index
    %41 = vector.load %arg10[%c0_23, %c0_24] : memref<128x128xbf16, #tpu.memory_space<vmem>>, vector<128x128xbf16>
    %42 = arith.truncf %1 : vector<8x128xf32> to vector<8x128xbf16>
    %cst_25 = arith.constant dense<0.000000e+00> : vector<8x128xf32>
    %43 = tpu.matmul %42, %40, %cst_25 {dimension_numbers = #tpu.dot_dimension_numbers<[1], [0], [0], [1], [0, 0, 1, 1], [], []>} : vector<8x128xbf16>, vector<128x128xbf16>, vector<8x128xf32> -> vector<8x128xf32>
    %c0_26 = arith.constant 0 : index
    %c0_27 = arith.constant 0 : index
    %44 = vector.load %arg9[%c0_26, %c0_27] : memref<1x128xf32, #tpu.memory_space<vmem>>, vector<1x128xf32>
    %45 = vector.broadcast %44 : vector<1x128xf32> to vector<8x128xf32>
    %46 = arith.addf %43, %45 : vector<8x128xf32>
    %cst_28 = arith.constant 0.000000e+00 : f32
    %47 = vector.broadcast %cst_28 : f32 to vector<8x128xf32>
    %48 = arith.maximumf %46, %47 : vector<8x128xf32>
    %49 = arith.truncf %39 : vector<8x128xf32> to vector<8x128xbf16>
    %cst_29 = arith.constant dense<0.000000e+00> : vector<8x128xf32>
    %50 = tpu.matmul %49, %41, %cst_29 {dimension_numbers = #tpu.dot_dimension_numbers<[1], [0], [0], [1], [0, 0, 1, 1], [], []>} : vector<8x128xbf16>, vector<128x128xbf16>, vector<8x128xf32> -> vector<8x128xf32>
    %c0_30 = arith.constant 0 : index
    %c0_31 = arith.constant 0 : index
    %51 = vector.load %arg11[%c0_30, %c0_31] : memref<1x128xf32, #tpu.memory_space<vmem>>, vector<1x128xf32>
    %52 = vector.broadcast %51 : vector<1x128xf32> to vector<8x128xf32>
    %53 = arith.addf %50, %52 : vector<8x128xf32>
    %cst_32 = arith.constant 0.000000e+00 : f32
    %54 = vector.broadcast %cst_32 : f32 to vector<8x128xf32>
    %55 = arith.maximumf %53, %54 : vector<8x128xf32>
    %56 = arith.mulf %48, %55 : vector<8x128xf32>
    %c0_33 = arith.constant 0 : index
    %c0_34 = arith.constant 0 : index
    %57 = vector.load %arg12[%c0_33, %c0_34] : memref<8x128xf32, #tpu.memory_space<vmem>>, vector<8x128xf32>
    tpu.vector_store %arg12[%c0_33, %c0_34], %56 {strides = array<i32>} : memref<8x128xf32, #tpu.memory_space<vmem>>, vector<8x128xf32>,
    return
  }
  func.func @transform_0(%arg0: i32) -> (i32, i32, i32) {
    %c0_i32 = arith.constant 0 : i32
    %c0_i32_0 = arith.constant 0 : i32
    %c0_i32_1 = arith.constant 0 : i32
    return %arg0, %c0_i32, %c0_i32_0 : i32, i32, i32
  }
  func.func @transform_1(%arg0: i32) -> (i32, i32) {
    %c0_i32 = arith.constant 0 : i32
    %c0_i32_0 = arith.constant 0 : i32
    return %arg0, %c0_i32 : i32, i32
  }
  func.func @transform_2(%arg0: i32) -> (i32, i32) {
    %c0_i32 = arith.constant 0 : i32
    %c0_i32_0 = arith.constant 0 : i32
    %c0_i32_1 = arith.constant 0 : i32
    return %c0_i32, %c0_i32_0 : i32, i32
  }
  func.func @transform_3(%arg0: i32) -> (i32, i32) {
    %c0_i32 = arith.constant 0 : i32
    %c0_i32_0 = arith.constant 0 : i32
    %c0_i32_1 = arith.constant 0 : i32
    return %c0_i32, %c0_i32_0 : i32, i32
  }
  func.func @transform_4(%arg0: i32) -> (i32, i32) {
    %c0_i32 = arith.constant 0 : i32
    %c0_i32_0 = arith.constant 0 : i32
    %c0_i32_1 = arith.constant 0 : i32
    return %c0_i32, %c0_i32_0 : i32, i32
  }
  func.func @transform_5(%arg0: i32) -> (i32, i32) {
    %c0_i32 = arith.constant 0 : i32
    %c0_i32_0 = arith.constant 0 : i32
    %c0_i32_1 = arith.constant 0 : i32
    return %c0_i32, %c0_i32_0 : i32, i32
  }
  func.func @transform_6(%arg0: i32) -> (i32, i32) {
    %c0_i32 = arith.constant 0 : i32
    %c0_i32_0 = arith.constant 0 : i32
    %c0_i32_1 = arith.constant 0 : i32
    return %c0_i32, %c0_i32_0 : i32, i32
  }
  func.func @transform_7(%arg0: i32) -> (i32, i32) {
    %c0_i32 = arith.constant 0 : i32
    %c0_i32_0 = arith.constant 0 : i32
    %c0_i32_1 = arith.constant 0 : i32
    return %c0_i32, %c0_i32_0 : i32, i32
  }
  func.func @transform_8(%arg0: i32) -> (i32, i32) {
    %c0_i32 = arith.constant 0 : i32
    %c0_i32_0 = arith.constant 0 : i32
    %c0_i32_1 = arith.constant 0 : i32
    return %c0_i32, %c0_i32_0 : i32, i32
  }
  func.func @transform_9(%arg0: i32) -> (i32, i32) {
    %c0_i32 = arith.constant 0 : i32
    %c0_i32_0 = arith.constant 0 : i32
    %c0_i32_1 = arith.constant 0 : i32
    return %c0_i32, %c0_i32_0 : i32, i32
  }
  func.func @transform_10(%arg0: i32) -> (i32, i32) {
    %c0_i32 = arith.constant 0 : i32
    %c0_i32_0 = arith.constant 0 : i32
    %c0_i32_1 = arith.constant 0 : i32
    return %c0_i32, %c0_i32_0 : i32, i32
  }
  func.func @transform_11(%arg0: i32) -> (i32, i32) {
    %c0_i32 = arith.constant 0 : i32
    %c0_i32_0 = arith.constant 0 : i32
    return %arg0, %c0_i32 : i32, i32
  }
}

module attributes {stable_mosaic.version = 11 : i64} {
  func.func @_gru_seq_kernel(%arg0: i32, %arg1: i32, %arg2: memref<1x8x128xf32, #tpu.memory_space<vmem>>, %arg3: memref<128x384xbf16, #tpu.memory_space<vmem>>, %arg4: memref<128x384xbf16, #tpu.memory_space<vmem>>, %arg5: memref<1x384xf32, #tpu.memory_space<vmem>>, %arg6: memref<1x384xf32, #tpu.memory_space<vmem>>, %arg7: memref<8x128xf32, #tpu.memory_space<vmem>>) attributes {dimension_semantics = [#tpu.dimension_semantics<parallel>, #tpu.dimension_semantics<arbitrary>], iteration_bounds = array<i64: 1, 8>, scalar_prefetch = 0 : i64, scratch_operands = 0 : i64, tpu.core_type = #tpu.core_type<tc>, window_params = [{transform_indices = @transform_0, window_bounds = array<i64: 1, 8, 128>}, {pipeline_mode = #tpu.pipeline_mode<synchronous>, transform_indices = @transform_1, window_bounds = array<i64: 128, 384>}, {pipeline_mode = #tpu.pipeline_mode<synchronous>, transform_indices = @transform_2, window_bounds = array<i64: 128, 384>}, {pipeline_mode = #tpu.pipeline_mode<synchronous>, transform_indices = @transform_3, window_bounds = array<i64: 1, 384>}, {pipeline_mode = #tpu.pipeline_mode<synchronous>, transform_indices = @transform_4, window_bounds = array<i64: 1, 384>}, {transform_indices = @transform_5, window_bounds = array<i64: 8, 128>}]} {
    %c0_i32 = arith.constant 0 : i32
    %0 = arith.cmpi eq, %arg1, %c0_i32 : i32
    %1 = arith.extui %0 : i1 to i32
    %c0_i32_0 = arith.constant 0 : i32
    %2 = arith.cmpi ne, %1, %c0_i32_0 : i32
    scf.if %2 {
      %cst_19 = arith.constant 0.000000e+00 : f32
      %45 = vector.broadcast %cst_19 : f32 to vector<8x128xf32>
      %c0_20 = arith.constant 0 : index
      %c0_21 = arith.constant 0 : index
      %46 = vector.load %arg7[%c0_20, %c0_21] : memref<8x128xf32, #tpu.memory_space<vmem>>, vector<8x128xf32>
      tpu.vector_store %arg7[%c0_20, %c0_21], %45 {strides = array<i32>} : memref<8x128xf32, #tpu.memory_space<vmem>>, vector<8x128xf32>,
    } else {
    }
    %c0 = arith.constant 0 : index
    %c0_1 = arith.constant 0 : index
    %c0_2 = arith.constant 0 : index
    %3 = vector.load %arg2[%c0, %c0_1, %c0_2] : memref<1x8x128xf32, #tpu.memory_space<vmem>>, vector<1x8x128xf32>
    %4 = vector.shape_cast %3 : vector<1x8x128xf32> to vector<8x128xf32>
    %c0_3 = arith.constant 0 : index
    %c0_4 = arith.constant 0 : index
    %5 = vector.load %arg7[%c0_3, %c0_4] : memref<8x128xf32, #tpu.memory_space<vmem>>, vector<8x128xf32>
    %c0_5 = arith.constant 0 : index
    %c0_6 = arith.constant 0 : index
    %6 = vector.load %arg3[%c0_5, %c0_6] : memref<128x384xbf16, #tpu.memory_space<vmem>>, vector<128x384xbf16>
    %c0_7 = arith.constant 0 : index
    %c0_8 = arith.constant 0 : index
    %7 = vector.load %arg4[%c0_7, %c0_8] : memref<128x384xbf16, #tpu.memory_space<vmem>>, vector<128x384xbf16>
    %8 = arith.truncf %4 : vector<8x128xf32> to vector<8x128xbf16>
    %cst = arith.constant dense<0.000000e+00> : vector<8x384xf32>
    %9 = tpu.matmul %8, %6, %cst {dimension_numbers = #tpu.dot_dimension_numbers<[1], [0], [0], [1], [0, 0, 1, 1], [], []>} : vector<8x128xbf16>, vector<128x384xbf16>, vector<8x384xf32> -> vector<8x384xf32>
    %c0_9 = arith.constant 0 : index
    %c0_10 = arith.constant 0 : index
    %10 = vector.load %arg5[%c0_9, %c0_10] : memref<1x384xf32, #tpu.memory_space<vmem>>, vector<1x384xf32>
    %11 = vector.broadcast %10 : vector<1x384xf32> to vector<8x384xf32>
    %12 = arith.addf %9, %11 : vector<8x384xf32>
    %13 = arith.truncf %5 : vector<8x128xf32> to vector<8x128xbf16>
    %cst_11 = arith.constant dense<0.000000e+00> : vector<8x384xf32>
    %14 = tpu.matmul %13, %7, %cst_11 {dimension_numbers = #tpu.dot_dimension_numbers<[1], [0], [0], [1], [0, 0, 1, 1], [], []>} : vector<8x128xbf16>, vector<128x384xbf16>, vector<8x384xf32> -> vector<8x384xf32>
    %c0_12 = arith.constant 0 : index
    %c0_13 = arith.constant 0 : index
    %15 = vector.load %arg6[%c0_12, %c0_13] : memref<1x384xf32, #tpu.memory_space<vmem>>, vector<1x384xf32>
    %16 = vector.broadcast %15 : vector<1x384xf32> to vector<8x384xf32>
    %17 = arith.addf %14, %16 : vector<8x384xf32>
    %18 = vector.extract_strided_slice %12 {offsets = [0, 0], sizes = [8, 128], strides = [1, 1]} : vector<8x384xf32> to vector<8x128xf32>
    %19 = vector.extract_strided_slice %17 {offsets = [0, 0], sizes = [8, 128], strides = [1, 1]} : vector<8x384xf32> to vector<8x128xf32>
    %20 = arith.addf %18, %19 : vector<8x128xf32>
    %21 = arith.negf %20 : vector<8x128xf32>
    %22 = math.exp %21 : vector<8x128xf32>
    %cst_14 = arith.constant 1.000000e+00 : f32
    %23 = vector.broadcast %cst_14 : f32 to vector<8x128xf32>
    %24 = arith.addf %23, %22 : vector<8x128xf32>
    %25 = arith.divf %23, %24 : vector<8x128xf32>
    %26 = vector.extract_strided_slice %12 {offsets = [0, 128], sizes = [8, 128], strides = [1, 1]} : vector<8x384xf32> to vector<8x128xf32>
    %27 = vector.extract_strided_slice %17 {offsets = [0, 128], sizes = [8, 128], strides = [1, 1]} : vector<8x384xf32> to vector<8x128xf32>
    %28 = arith.addf %26, %27 : vector<8x128xf32>
    %29 = arith.negf %28 : vector<8x128xf32>
    %30 = math.exp %29 : vector<8x128xf32>
    %cst_15 = arith.constant 1.000000e+00 : f32
    %31 = vector.broadcast %cst_15 : f32 to vector<8x128xf32>
    %32 = arith.addf %31, %30 : vector<8x128xf32>
    %33 = arith.divf %31, %32 : vector<8x128xf32>
    %34 = vector.extract_strided_slice %12 {offsets = [0, 256], sizes = [8, 128], strides = [1, 1]} : vector<8x384xf32> to vector<8x128xf32>
    %35 = vector.extract_strided_slice %17 {offsets = [0, 256], sizes = [8, 128], strides = [1, 1]} : vector<8x384xf32> to vector<8x128xf32>
    %36 = arith.mulf %25, %35 : vector<8x128xf32>
    %37 = arith.addf %34, %36 : vector<8x128xf32>
    %38 = math.tanh %37 : vector<8x128xf32>
    %cst_16 = arith.constant 1.000000e+00 : f32
    %39 = vector.broadcast %cst_16 : f32 to vector<8x128xf32>
    %40 = arith.subf %39, %33 : vector<8x128xf32>
    %41 = arith.mulf %40, %38 : vector<8x128xf32>
    %42 = arith.mulf %33, %5 : vector<8x128xf32>
    %43 = arith.addf %41, %42 : vector<8x128xf32>
    %c0_17 = arith.constant 0 : index
    %c0_18 = arith.constant 0 : index
    %44 = vector.load %arg7[%c0_17, %c0_18] : memref<8x128xf32, #tpu.memory_space<vmem>>, vector<8x128xf32>
    tpu.vector_store %arg7[%c0_17, %c0_18], %43 {strides = array<i32>} : memref<8x128xf32, #tpu.memory_space<vmem>>, vector<8x128xf32>,
    return
  }
  func.func @transform_0(%arg0: i32, %arg1: i32) -> (i32, i32, i32) {
    %c0_i32 = arith.constant 0 : i32
    %c0_i32_0 = arith.constant 0 : i32
    return %arg1, %arg0, %c0_i32 : i32, i32, i32
  }
  func.func @transform_1(%arg0: i32, %arg1: i32) -> (i32, i32) {
    %c0_i32 = arith.constant 0 : i32
    %c0_i32_0 = arith.constant 0 : i32
    %c0_i32_1 = arith.constant 0 : i32
    return %c0_i32, %c0_i32_0 : i32, i32
  }
  func.func @transform_2(%arg0: i32, %arg1: i32) -> (i32, i32) {
    %c0_i32 = arith.constant 0 : i32
    %c0_i32_0 = arith.constant 0 : i32
    %c0_i32_1 = arith.constant 0 : i32
    return %c0_i32, %c0_i32_0 : i32, i32
  }
  func.func @transform_3(%arg0: i32, %arg1: i32) -> (i32, i32) {
    %c0_i32 = arith.constant 0 : i32
    %c0_i32_0 = arith.constant 0 : i32
    %c0_i32_1 = arith.constant 0 : i32
    return %c0_i32, %c0_i32_0 : i32, i32
  }
  func.func @transform_4(%arg0: i32, %arg1: i32) -> (i32, i32) {
    %c0_i32 = arith.constant 0 : i32
    %c0_i32_0 = arith.constant 0 : i32
    %c0_i32_1 = arith.constant 0 : i32
    return %c0_i32, %c0_i32_0 : i32, i32
  }
  func.func @transform_5(%arg0: i32, %arg1: i32) -> (i32, i32) {
    %c0_i32 = arith.constant 0 : i32
    %c0_i32_0 = arith.constant 0 : i32
    return %arg0, %c0_i32 : i32, i32
  }
}

</mosaic_0001>

<llo_original>
// kernel: base_model_forward.2
$region0: #{base_model_forward.2}
  #allocation0 [shape = 'u32[]', space=smem, size = 0x4, offset = 0x4, fixed_abs, tag = 'smem constant byte address 0x4 - core index']
  #allocation1 [shape = 'u32[72,128]{1,0:T(1,128)}', space=vmem, size = 0x9000, scoped, tag = 'internal scratch']
  %s0 = inlined_call_operand.vmem [shape: f32[8,8,128], index: 0, kind: input, shape index: {}]
  %s1 = inlined_call_operand.vmem [shape: bf16[128,384], index: 1, kind: input, shape index: {}]
  %s2 = inlined_call_operand.vmem [shape: bf16[128,384], index: 2, kind: input, shape index: {}]
  %s3 = inlined_call_operand.vmem [shape: f32[1,384], index: 3, kind: input, shape index: {}]
  %s4 = inlined_call_operand.vmem [shape: f32[1,384], index: 4, kind: input, shape index: {}]
  %s5 = inlined_call_operand.vmem [shape: f32[8,128], index: 5, kind: output, shape index: {}]
  %s6 = sld [smem:[#allocation0]]
  $region57: #{base_model_forward.2} parent=0
    _
  %s8 = ssub.s32 1, %s6
  %s9 = scalar_select 0, %s8, %s6
  loop: start=0, step=1, limit=10
  $region2: #{base_model_forward.2} parent=0 // loop_pre_header
    _
  $region3: #{base_model_forward.2} parent=0 // loop_header
    %s11 = sphi 0, %s15
    %p12 = scmp.ge.s32.totalorder %s11, 10
    %s18 = sphi 0, %s30
    %s19 = sphi 0, %s26
    %s20 = sphi 0, %s18
    %s21 = sphi 0, %s19
    %s22 = sphi 0, %s20
    %s23 = sphi 0, %s21
    %s35 = sphi 0, %s37
    %s38 = sphi 0, %s35
    %s39 = sphi 0, %s38
    %s55 = sphi 0, %s39
    %s59 = sphi 0, %s59
    %s61 = sphi 0, %s59
    %s62 = sphi 0, %s61
    %s76 = sphi 0, %s62
    %s80 = sphi 0, %s80
    %s82 = sphi 0, %s80
    %s83 = sphi 0, %s82
    %s97 = sphi 0, %s83
    %s101 = sphi 0, %s101
    %s103 = sphi 0, %s101
    %s104 = sphi 0, %s103
    %s118 = sphi 0, %s104
    %s122 = sphi 0, %s122
    %s124 = sphi 0, %s122
    %s125 = sphi 0, %s124
    %s139 = sphi 0, %s125
    %s145 = sphi 0, %s147
    %s148 = sphi 0, %s145
    %s149 = sphi 0, %s148
    %s165 = sphi 0, %s149
  $region4: #{base_model_forward.2} parent=0 // loop_header_branch
    %14 = sbr.rel (%p12) target = $region8
  $region5: #{base_model_forward.2} parent=0 // loop_body
    %s16 = ssub.s32 %s11, 1
    %s17 = ssub.s32 %s11, 2
    %s24 = sadd.s32 1, %s19
    %p25 = scmp.ge.s32.totalorder %s24, 8
    %s26 = scalar_select %p25, 0, %s24
    %s27 = sadd.s32 1, %s18
    %s28 = scalar_select %p25, %s27, %s18
    %p29 = scmp.ge.s32.totalorder %s28, 1
    %s30 = scalar_select %p29, 0, %s28
    %s31 = ssub.s32 %s19, %s26
    %s32 = ssub.s32 %s18, %s30
    %s33 = sor.u32 %s31, %s32
    %p34 = scmp.eq.s32.totalorder %s33, 0
    %s36 = sadd.s32 %s35, 1
    %s37 = scalar_select %p34, %s35, %s36
    %p40 = pneg %p34
    %p41 = scmp.eq.s32.totalorder %s11, 7
    %p42 = por %p40, %p41
    %p43 = scmp.ne.s32.totalorder %s35, %s38
    %p44 = scmp.eq.s32.totalorder %s11, 0
    %p45 = por %p43, %p44
    %p46 = scmp.ne.s32.totalorder %s35, %s38
    %p47 = scmp.eq.s32.totalorder %s16, 7
    %p48 = por %p46, %p47
    %p49 = scmp.ne.s32.totalorder %s38, %s39
    %p50 = scmp.eq.s32.totalorder %s16, 0
    %p51 = por %p49, %p50
    %p52 = scmp.ne.s32.totalorder %s38, %s39
    %p53 = scmp.eq.s32.totalorder %s17, 7
    %p54 = por %p52, %p53
    %p56 = scmp.ne.s32.totalorder %s39, %s55
    %p57 = scmp.eq.s32.totalorder %s17, 0
    %p58 = por %p56, %p57
    %s60 = sadd.s32 %s59, 1
    %p63 = scmp.eq.s32.totalorder %s11, 7
    %p64 = scmp.ne.s32.totalorder %s59, %s61
    %p65 = scmp.eq.s32.totalorder %s11, 0
    %p66 = por %p64, %p65
    %p67 = scmp.ne.s32.totalorder %s59, %s61
    %p68 = scmp.eq.s32.totalorder %s16, 7
    %p69 = por %p67, %p68
    %p70 = scmp.ne.s32.totalorder %s61, %s62
    %p71 = scmp.eq.s32.totalorder %s16, 0
    %p72 = por %p70, %p71
    %p73 = scmp.ne.s32.totalorder %s61, %s62
    %p74 = scmp.eq.s32.totalorder %s17, 7
    %p75 = por %p73, %p74
    %p77 = scmp.ne.s32.totalorder %s62, %s76
    %p78 = scmp.eq.s32.totalorder %s17, 0
    %p79 = por %p77, %p78
    %s81 = sadd.s32 %s80, 1
    %p84 = scmp.eq.s32.totalorder %s11, 7
    %p85 = scmp.ne.s32.totalorder %s80, %s82
    %p86 = scmp.eq.s32.totalorder %s11, 0
    %p87 = por %p85, %p86
    %p88 = scmp.ne.s32.totalorder %s80, %s82
    %p89 = scmp.eq.s32.totalorder %s16, 7
    %p90 = por %p88, %p89
    %p91 = scmp.ne.s32.totalorder %s82, %s83
    %p92 = scmp.eq.s32.totalorder %s16, 0
    %p93 = por %p91, %p92
    %p94 = scmp.ne.s32.totalorder %s82, %s83
    %p95 = scmp.eq.s32.totalorder %s17, 7
    %p96 = por %p94, %p95
    %p98 = scmp.ne.s32.totalorder %s83, %s97
    %p99 = scmp.eq.s32.totalorder %s17, 0
    %p100 = por %p98, %p99
    %s102 = sadd.s32 %s101, 1
    %p105 = scmp.eq.s32.totalorder %s11, 7
    %p106 = scmp.ne.s32.totalorder %s101, %s103
    %p107 = scmp.eq.s32.totalorder %s11, 0
    %p108 = por %p106, %p107
    %p109 = scmp.ne.s32.totalorder %s101, %s103
    %p110 = scmp.eq.s32.totalorder %s16, 7
    %p111 = por %p109, %p110
    %p112 = scmp.ne.s32.totalorder %s103, %s104
    %p113 = scmp.eq.s32.totalorder %s16, 0
    %p114 = por %p112, %p113
    %p115 = scmp.ne.s32.totalorder %s103, %s104
    %p116 = scmp.eq.s32.totalorder %s17, 7
    %p117 = por %p115, %p116
    %p119 = scmp.ne.s32.totalorder %s104, %s118
    %p120 = scmp.eq.s32.totalorder %s17, 0
    %p121 = por %p119, %p120
    %s123 = sadd.s32 %s122, 1
    %p126 = scmp.eq.s32.totalorder %s11, 7
    %p127 = scmp.ne.s32.totalorder %s122, %s124
    %p128 = scmp.eq.s32.totalorder %s11, 0
    %p129 = por %p127, %p128
    %p130 = scmp.ne.s32.totalorder %s122, %s124
    %p131 = scmp.eq.s32.totalorder %s16, 7
    %p132 = por %p130, %p131
    %p133 = scmp.ne.s32.totalorder %s124, %s125
    %p134 = scmp.eq.s32.totalorder %s16, 0
    %p135 = por %p133, %p134
    %p136 = scmp.ne.s32.totalorder %s124, %s125
    %p137 = scmp.eq.s32.totalorder %s17, 7
    %p138 = por %p136, %p137
    %p140 = scmp.ne.s32.totalorder %s125, %s139
    %p141 = scmp.eq.s32.totalorder %s17, 0
    %p142 = por %p140, %p141
    %s143 = ssub.s32 %s18, %s30
    %p144 = scmp.eq.s32.totalorder %s143, 0
    %s146 = sadd.s32 %s145, 1
    %s147 = scalar_select %p144, %s145, %s146
    %p150 = pneg %p144
    %p151 = scmp.eq.s32.totalorder %s11, 7
    %p152 = por %p150, %p151
    %p153 = scmp.ne.s32.totalorder %s145, %s148
    %p154 = scmp.eq.s32.totalorder %s11, 0
    %p155 = por %p153, %p154
    %p156 = scmp.ne.s32.totalorder %s145, %s148
    %p157 = scmp.eq.s32.totalorder %s16, 7
    %p158 = por %p156, %p157
    %p159 = scmp.ne.s32.totalorder %s148, %s149
    %p160 = scmp.eq.s32.totalorder %s16, 0
    %p161 = por %p159, %p160
    %p162 = scmp.ne.s32.totalorder %s148, %s149
    %p163 = scmp.eq.s32.totalorder %s17, 7
    %p164 = por %p162, %p163
    %p166 = scmp.ne.s32.totalorder %s149, %s165
    %p167 = scmp.eq.s32.totalorder %s17, 0
    %p168 = por %p166, %p167
    %p169 = scmp.le.s32.totalorder 1, %s11
    %p170 = scmp.lt.s32.totalorder %s11, 9
    %p171 = pnand %p169, %p170
    %p172 = pneg %p171
    // Predicated region
    $region9: #{base_model_forward.2} parent=5 // pred_check
      _
    $region10: #{base_model_forward.2} parent=5 // pred_check_branch
      %174 = sbr.rel (%p171) target = $region12
    $region11: #{base_model_forward.2} parent=5 // pred_region
      %s175 = ssub.s32 %s11, 1
      // Predicated region
      $region13: #{base_model_forward.2} parent=11 // pred_check
        %p176 = pneg %p72
      $region14: #{base_model_forward.2} parent=11 // pred_check_branch
        %178 = sbr.rel (%p176) target = $region16
      $region15: #{base_model_forward.2} parent=11 // pred_region
        _
      $region16: #{base_model_forward.2} parent=11 // pred_fallthru
        _
      // Predicated region
      $region17: #{base_model_forward.2} parent=11 // pred_check
        %p179 = pneg %p93
      $region18: #{base_model_forward.2} parent=11 // pred_check_branch
        %181 = sbr.rel (%p179) target = $region20
      $region19: #{base_model_forward.2} parent=11 // pred_region
        _
      $region20: #{base_model_forward.2} parent=11 // pred_fallthru
        _
      // Predicated region
      $region21: #{base_model_forward.2} parent=11 // pred_check
        %p182 = pneg %p114
      $region22: #{base_model_forward.2} parent=11 // pred_check_branch
        %184 = sbr.rel (%p182) target = $region24
      $region23: #{base_model_forward.2} parent=11 // pred_region
        _
      $region24: #{base_model_forward.2} parent=11 // pred_fallthru
        _
      // Predicated region
      $region25: #{base_model_forward.2} parent=11 // pred_check
        %p185 = pneg %p135
      $region26: #{base_model_forward.2} parent=11 // pred_check_branch
        %187 = sbr.rel (%p185) target = $region28
      $region27: #{base_model_forward.2} parent=11 // pred_region
        _
      $region28: #{base_model_forward.2} parent=11 // pred_fallthru
        _
    $region12: #{base_model_forward.2} parent=5 // pred_fallthru
      _
    %p188 = scmp.lt.s32.totalorder %s11, 8
    // Predicated region
    $region29: #{base_model_forward.2} parent=5 // pred_check
      %p189 = pneg %p188
    $region30: #{base_model_forward.2} parent=5 // pred_check_branch
      %191 = sbr.rel (%p189) target = $region32
    $region31: #{base_model_forward.2} parent=5 // pred_region
      // Predicated region
      $region33: #{base_model_forward.2} parent=31 // pred_check
        %p192 = pneg %p45
      $region34: #{base_model_forward.2} parent=31 // pred_check_branch
        %194 = sbr.rel (%p192) target = $region36
      $region35: #{base_model_forward.2} parent=31 // pred_region
        %p195 = scmp.lt.s32.totalorder %s19, 7
        %s196 = scalar_select %p195, %s19, 7
        %p197 = scmp.lt.s32.totalorder %s18, 0
        %s198 = scalar_select %p197, %s18, 0
        %s199 = sadd.s32 %s198, %s196
        %s200 = smul.addr %s199, 8
        %s201 = scalar_lea.vmem %s0, %s200
      $region36: #{base_model_forward.2} parent=31 // pred_fallthru
        _
    $region32: #{base_model_forward.2} parent=5 // pred_fallthru
      _
    %p202 = scmp.le.s32.totalorder 1, %s11
    %p203 = scmp.lt.s32.totalorder %s11, 9
    %p204 = pnand %p202, %p203
    %p205 = pneg %p204
    // Predicated region
    $region37: #{base_model_forward.2} parent=5 // pred_check
      _
    $region38: #{base_model_forward.2} parent=5 // pred_check_branch
      %207 = sbr.rel (%p204) target = $region40
    $region39: #{base_model_forward.2} parent=5 // pred_region
      %s208 = ssub.s32 %s11, 1
      %p209 = scmp.lt.s32.totalorder %s21, 7
      %s210 = scalar_select %p209, %s21, 7
      %p211 = scmp.lt.s32.totalorder %s20, 0
      %s212 = scalar_select %p211, %s20, 0
      %s213 = sadd.s32 %s212, %s210
      %s214 = smul.addr %s213, 8
      %s215 = scalar_lea.vmem %s0, %s214
      %p216 = pneg %p51
      %p217 = pneg %p48
      %p218 = pneg %p72
      %p219 = pneg %p69
      %p220 = pneg %p93
      %p221 = pneg %p90
      %p222 = pneg %p114
      %p223 = pneg %p111
      %p224 = pneg %p135
      %p225 = pneg %p132
      %p226 = pneg %p161
      %p227 = pneg %p158
      %p228 = scmp.lt.s32.totalorder %s20, 0
      %s229 = scalar_select %p228, %s20, 0
      %s230 = smul.addr %s229, 8
      %s231 = scalar_lea.vmem %s5, %s230
      %p232 = scmp.lt.s32.totalorder %s21, 7
      %s233 = scalar_select %p232, %s21, 7
      %p234 = scmp.lt.s32.totalorder %s20, 0
      %s235 = scalar_select %p234, %s20, 0
      %s236 = sadd.s32 %s235, %s233
      %s237 = smul.addr %s236, 8
      %s238 = scalar_lea.vmem %s0, %s237
      %p239 = scmp.lt.s32.totalorder %s20, 0
      %s240 = scalar_select %p239, %s20, 0
      %s241 = smul.addr %s240, 8
      %s242 = scalar_lea.vmem %s5, %s241
      %p243 = scmp.eq.s32.totalorder %s21, 0
      // Predicated region
      $region41: #{base_model_forward.2} parent=39 // pred_check
        %p244 = pneg %p243
      $region42: #{base_model_forward.2} parent=39 // pred_check_branch
        %246 = sbr.rel (%p244) target = $region44
      $region43: #{base_model_forward.2} parent=39 // pred_region
        %247 = vst [vmem:[%s242] sm:$0xff] 0.0
      $region44: #{base_model_forward.2} parent=39 // pred_fallthru
        _
      %v248 = vld [vmem:[%s238] sm:$0xff]
      %v249 = vld [vmem:[%s242] sm:$0xff]
      %v250 = vld [vmem:[%s1] sm:$0xff]
      %v251 = vld [vmem:[%s1 + $0x8] sm:$0xf]
      %v252 = vld [vmem:[%s1 + $0xc] sm:$0xff]
      %v253 = vld [vmem:[%s1 + $0x14] sm:$0xf]
      %v254 = vld [vmem:[%s1 + $0x18] sm:$0xff]
      %v255 = vld [vmem:[%s1 + $0x20] sm:$0xf]
      %v256 = vld [vmem:[%s1 + $0x24] sm:$0xff]
      %v257 = vld [vmem:[%s1 + $0x2c] sm:$0xf]
      %v258 = vld [vmem:[%s1 + $0x30] sm:$0xff]
      %v259 = vld [vmem:[%s1 + $0x38] sm:$0xf]
      %v260 = vld [vmem:[%s1 + $0x3c] sm:$0xff]
      %v261 = vld [vmem:[%s1 + $0x44] sm:$0xf]
      %v262 = vld [vmem:[%s1 + $0x48] sm:$0xff]
      %v263 = vld [vmem:[%s1 + $0x50] sm:$0xf]
      %v264 = vld [vmem:[%s1 + $0x54] sm:$0xff]
      %v265 = vld [vmem:[%s1 + $0x5c] sm:$0xf]
      %v266 = vld [vmem:[%s1 + $0x60] sm:$0xff]
      %v267 = vld [vmem:[%s1 + $0x68] sm:$0xf]
      %v268 = vld [vmem:[%s1 + $0x6c] sm:$0xff]
      %v269 = vld [vmem:[%s1 + $0x74] sm:$0xf]
      %v270 = vld [vmem:[%s1 + $0x78] sm:$0xff]
      %v271 = vld [vmem:[%s1 + $0x80] sm:$0xf]
      %v272 = vld [vmem:[%s1 + $0x84] sm:$0xff]
      %v273 = vld [vmem:[%s1 + $0x8c] sm:$0xf]
      %v274 = vld [vmem:[%s1 + $0x90] sm:$0xff]
      %v275 = vld [vmem:[%s1 + $0x98] sm:$0xf]
      %v276 = vld [vmem:[%s1 + $0x9c] sm:$0xff]
      %v277 = vld [vmem:[%s1 + $0xa4] sm:$0xf]
      %v278 = vld [vmem:[%s1 + $0xa8] sm:$0xff]
      %v279 = vld [vmem:[%s1 + $0xb0] sm:$0xf]
      %v280 = vld [vmem:[%s1 + $0xb4] sm:$0xff]
      %v281 = vld [vmem:[%s1 + $0xbc] sm:$0xf]
      %v282 = vld [vmem:[%s2] sm:$0xff]
      %v283 = vld [vmem:[%s2 + $0x8] sm:$0xf]
      %v284 = vld [vmem:[%s2 + $0xc] sm:$0xff]
      %v285 = vld [vmem:[%s2 + $0x14] sm:$0xf]
      %v286 = vld [vmem:[%s2 + $0x18] sm:$0xff]
      %v287 = vld [vmem:[%s2 + $0x20] sm:$0xf]
      %v288 = vld [vmem:[%s2 + $0x24] sm:$0xff]
      %v289 = vld [vmem:[%s2 + $0x2c] sm:$0xf]
      %v290 = vld [vmem:[%s2 + $0x30] sm:$0xff]
      %v291 = vld [vmem:[%s2 + $0x38] sm:$0xf]
      %v292 = vld [vmem:[%s2 + $0x3c] sm:$0xff]
      %v293 = vld [vmem:[%s2 + $0x44] sm:$0xf]
      %v294 = vld [vmem:[%s2 + $0x48] sm:$0xff]
      %v295 = vld [vmem:[%s2 + $0x50] sm:$0xf]
      %v296 = vld [vmem:[%s2 + $0x54] sm:$0xff]
      %v297 = vld [vmem:[%s2 + $0x5c] sm:$0xf]
      %v298 = vld [vmem:[%s2 + $0x60] sm:$0xff]
      %v299 = vld [vmem:[%s2 + $0x68] sm:$0xf]
      %v300 = vld [vmem:[%s2 + $0x6c] sm:$0xff]
      %v301 = vld [vmem:[%s2 + $0x74] sm:$0xf]
      %v302 = vld [vmem:[%s2 + $0x78] sm:$0xff]
      %v303 = vld [vmem:[%s2 + $0x80] sm:$0xf]
      %v304 = vld [vmem:[%s2 + $0x84] sm:$0xff]
      %v305 = vld [vmem:[%s2 + $0x8c] sm:$0xf]
      %v306 = vld [vmem:[%s2 + $0x90] sm:$0xff]
      %v307 = vld [vmem:[%s2 + $0x98] sm:$0xf]
      %v308 = vld [vmem:[%s2 + $0x9c] sm:$0xff]
      %v309 = vld [vmem:[%s2 + $0xa4] sm:$0xf]
      %v310 = vld [vmem:[%s2 + $0xa8] sm:$0xff]
      %v311 = vld [vmem:[%s2 + $0xb0] sm:$0xf]
      %v312 = vld [vmem:[%s2 + $0xb4] sm:$0xff]
      %v313 = vld [vmem:[%s2 + $0xbc] sm:$0xf]
      %v314 = vpack.c.bf16 %v248, %v248
      %v315 = vld [vmem:[%s3] sm:$0x7]
      %v317 = vperm.slane %v315, 0
      %v318 = vperm.slane %v315, 1
      %v319 = vperm.slane %v315, 2
      %v355 = vunpack.c.l.b16 %v250
      %v356 = vunpack.c.h.b16 %v250
      %v357 = vunpack.c.l.b16 %v251
      %v358 = vunpack.c.l.b16 %v252
      %v359 = vunpack.c.h.b16 %v252
      %v360 = vunpack.c.l.b16 %v253
      %v361 = vunpack.c.l.b16 %v254
      %v362 = vunpack.c.h.b16 %v254
      %v363 = vunpack.c.l.b16 %v255
      %v364 = vunpack.c.l.b16 %v256
      %v365 = vunpack.c.h.b16 %v256
      %v366 = vunpack.c.l.b16 %v257
      %v367 = vunpack.c.l.b16 %v258
      %v368 = vunpack.c.h.b16 %v258
      %v369 = vunpack.c.l.b16 %v259
      %v370 = vunpack.c.l.b16 %v260
      %v371 = vunpack.c.h.b16 %v260
      %v372 = vunpack.c.l.b16 %v261
      %v373 = vunpack.c.l.b16 %v262
      %v374 = vunpack.c.h.b16 %v262
      %v375 = vunpack.c.l.b16 %v263
      %v376 = vunpack.c.l.b16 %v264
      %v377 = vunpack.c.h.b16 %v264
      %v378 = vunpack.c.l.b16 %v265
      %v379 = vunpack.c.l.b16 %v266
      %v380 = vunpack.c.h.b16 %v266
      %v381 = vunpack.c.l.b16 %v267
      %v382 = vunpack.c.l.b16 %v268
      %v383 = vunpack.c.h.b16 %v268
      %v384 = vunpack.c.l.b16 %v269
      %v385 = vunpack.c.l.b16 %v270
      %v386 = vunpack.c.h.b16 %v270
      %v387 = vunpack.c.l.b16 %v271
      %v388 = vunpack.c.l.b16 %v272
      %v389 = vunpack.c.h.b16 %v272
      %v390 = vunpack.c.l.b16 %v273
      %v391 = vunpack.c.l.b16 %v274
      %v392 = vunpack.c.h.b16 %v274
      %v393 = vunpack.c.l.b16 %v275
      %v394 = vunpack.c.l.b16 %v276
      %v395 = vunpack.c.h.b16 %v276
      %v396 = vunpack.c.l.b16 %v277
      %v397 = vunpack.c.l.b16 %v278
      %v398 = vunpack.c.h.b16 %v278
      %v399 = vunpack.c.l.b16 %v279
      %v400 = vunpack.c.l.b16 %v280
      %v401 = vunpack.c.h.b16 %v280
      %v402 = vunpack.c.l.b16 %v281
      %v403 = vpack.c.b16 %v358, %v355
      %v404 = vpack.c.b16 %v359, %v356
      %v405 = vpack.c.b16 %v360, %v357
      %v406 = vpack.c.b16 %v364, %v361
      %v407 = vpack.c.b16 %v365, %v362
      %v408 = vpack.c.b16 %v366, %v363
      %v409 = vpack.c.b16 %v370, %v367
      %v410 = vpack.c.b16 %v371, %v368
      %v411 = vpack.c.b16 %v372, %v369
      %v412 = vpack.c.b16 %v376, %v373
      %v413 = vpack.c.b16 %v377, %v374
      %v414 = vpack.c.b16 %v378, %v375
      %v415 = vpack.c.b16 %v382, %v379
      %v416 = vpack.c.b16 %v383, %v380
      %v417 = vpack.c.b16 %v384, %v381
      %v418 = vpack.c.b16 %v388, %v385
      %v419 = vpack.c.b16 %v389, %v386
      %v420 = vpack.c.b16 %v390, %v387
      %v421 = vpack.c.b16 %v394, %v391
      %v422 = vpack.c.b16 %v395, %v392
      %v423 = vpack.c.b16 %v396, %v393
      %v424 = vpack.c.b16 %v400, %v397
      %v425 = vpack.c.b16 %v401, %v398
      %v426 = vpack.c.b16 %v402, %v399
      %451 = vmatpush.bf16.msra.mxu0 %v424
      %452 = vmatpush.bf16.msra.mxu0 %v421
      %453 = vmatpush.bf16.msra.mxu0 %v418
      %454 = vmatpush.bf16.msra.mxu0 %v415
      %455 = vmatpush.bf16.msra.mxu0 %v412
      %456 = vmatpush.bf16.msra.mxu0 %v409
      %457 = vmatpush.bf16.msra.mxu0 %v406
      %458 = vmatpush.bf16.msra.mxu0 %v403
      %459 = vmatmul.bf16.gmra.mxu0 %v314
      %v460 = vpop.f32.mrf.mxu0
      %v461 = vadd.f32 %v317, %v460
      %v462 = vpop.f32.mrf.mxu0
      %463 = vdwg.mxu0
      %464 = vmatpush.bf16.msra.mxu0 %v425
      %465 = vmatpush.bf16.msra.mxu0 %v422
      %466 = vmatpush.bf16.msra.mxu0 %v419
      %467 = vmatpush.bf16.msra.mxu0 %v416
      %468 = vmatpush.bf16.msra.mxu0 %v413
      %469 = vmatpush.bf16.msra.mxu0 %v410
      %470 = vmatpush.bf16.msra.mxu0 %v407
      %471 = vmatpush.bf16.msra.mxu0 %v404
      %472 = vmatmul.bf16.gmra.mxu0 %v314
      %v473 = vpop.f32.mrf.mxu0
      %v474 = vadd.f32 %v318, %v473
      %v475 = vpop.f32.mrf.mxu0
      %476 = vdwg.mxu0
      %477 = vmatpush.bf16.msra.mxu0 %v426
      %478 = vmatpush.bf16.msra.mxu0 %v423
      %479 = vmatpush.bf16.msra.mxu0 %v420
      %480 = vmatpush.bf16.msra.mxu0 %v417
      %481 = vmatpush.bf16.msra.mxu0 %v414
      %482 = vmatpush.bf16.msra.mxu0 %v411
      %483 = vmatpush.bf16.msra.mxu0 %v408
      %484 = vmatpush.bf16.msra.mxu0 %v405
      %485 = vmatmul.bf16.gmra.mxu0 %v314
      %v486 = vpop.f32.mrf.mxu0
      %v487 = vadd.f32 %v319, %v486
      %v488 = vpop.f32.mrf.mxu0
      %489 = vdwg.mxu0
      %v490 = vpack.c.bf16 %v249, %v249
      %v491 = vld [vmem:[%s4] sm:$0x7]
      %v493 = vperm.slane %v491, 0
      %v494 = vperm.slane %v491, 1
      %v495 = vperm.slane %v491, 2
      %v531 = vunpack.c.l.b16 %v282
      %v532 = vunpack.c.h.b16 %v282
      %v533 = vunpack.c.l.b16 %v283
      %v534 = vunpack.c.l.b16 %v284
      %v535 = vunpack.c.h.b16 %v284
      %v536 = vunpack.c.l.b16 %v285
      %v537 = vunpack.c.l.b16 %v286
      %v538 = vunpack.c.h.b16 %v286
      %v539 = vunpack.c.l.b16 %v287
      %v540 = vunpack.c.l.b16 %v288
      %v541 = vunpack.c.h.b16 %v288
      %v542 = vunpack.c.l.b16 %v289
      %v543 = vunpack.c.l.b16 %v290
      %v544 = vunpack.c.h.b16 %v290
      %v545 = vunpack.c.l.b16 %v291
      %v546 = vunpack.c.l.b16 %v292
      %v547 = vunpack.c.h.b16 %v292
      %v548 = vunpack.c.l.b16 %v293
      %v549 = vunpack.c.l.b16 %v294
      %v550 = vunpack.c.h.b16 %v294
      %v551 = vunpack.c.l.b16 %v295
      %v552 = vunpack.c.l.b16 %v296
      %v553 = vunpack.c.h.b16 %v296
      %v554 = vunpack.c.l.b16 %v297
      %v555 = vunpack.c.l.b16 %v298
      %v556 = vunpack.c.h.b16 %v298
      %v557 = vunpack.c.l.b16 %v299
      %v558 = vunpack.c.l.b16 %v300
      %v559 = vunpack.c.h.b16 %v300
      %v560 = vunpack.c.l.b16 %v301
      %v561 = vunpack.c.l.b16 %v302
      %v562 = vunpack.c.h.b16 %v302
      %v563 = vunpack.c.l.b16 %v303
      %v564 = vunpack.c.l.b16 %v304
      %v565 = vunpack.c.h.b16 %v304
      %v566 = vunpack.c.l.b16 %v305
      %v567 = vunpack.c.l.b16 %v306
      %v568 = vunpack.c.h.b16 %v306
      %v569 = vunpack.c.l.b16 %v307
      %v570 = vunpack.c.l.b16 %v308
      %v571 = vunpack.c.h.b16 %v308
      %v572 = vunpack.c.l.b16 %v309
      %v573 = vunpack.c.l.b16 %v310
      %v574 = vunpack.c.h.b16 %v310
      %v575 = vunpack.c.l.b16 %v311
      %v576 = vunpack.c.l.b16 %v312
      %v577 = vunpack.c.h.b16 %v312
      %v578 = vunpack.c.l.b16 %v313
      %v579 = vpack.c.b16 %v534, %v531
      %v580 = vpack.c.b16 %v535, %v532
      %v581 = vpack.c.b16 %v536, %v533
      %v582 = vpack.c.b16 %v540, %v537
      %v583 = vpack.c.b16 %v541, %v538
      %v584 = vpack.c.b16 %v542, %v539
      %v585 = vpack.c.b16 %v546, %v543
      %v586 = vpack.c.b16 %v547, %v544
      %v587 = vpack.c.b16 %v548, %v545
      %v588 = vpack.c.b16 %v552, %v549
      %v589 = vpack.c.b16 %v553, %v550
      %v590 = vpack.c.b16 %v554, %v551
      %v591 = vpack.c.b16 %v558, %v555
      %v592 = vpack.c.b16 %v559, %v556
      %v593 = vpack.c.b16 %v560, %v557
      %v594 = vpack.c.b16 %v564, %v561
      %v595 = vpack.c.b16 %v565, %v562
      %v596 = vpack.c.b16 %v566, %v563
      %v597 = vpack.c.b16 %v570, %v567
      %v598 = vpack.c.b16 %v571, %v568
      %v599 = vpack.c.b16 %v572, %v569
      %v600 = vpack.c.b16 %v576, %v573
      %v601 = vpack.c.b16 %v577, %v574
      %v602 = vpack.c.b16 %v578, %v575
      %627 = vmatpush.bf16.msra.mxu0 %v600
      %628 = vmatpush.bf16.msra.mxu0 %v597
      %629 = vmatpush.bf16.msra.mxu0 %v594
      %630 = vmatpush.bf16.msra.mxu0 %v591
      %631 = vmatpush.bf16.msra.mxu0 %v588
      %632 = vmatpush.bf16.msra.mxu0 %v585
      %633 = vmatpush.bf16.msra.mxu0 %v582
      %634 = vmatpush.bf16.msra.mxu0 %v579
      %635 = vmatmul.bf16.gmra.mxu0 %v490
      %v636 = vpop.f32.mrf.mxu0
      %v637 = vadd.f32 %v493, %v636
      %v638 = vpop.f32.mrf.mxu0
      %639 = vdwg.mxu0
      %640 = vmatpush.bf16.msra.mxu0 %v601
      %641 = vmatpush.bf16.msra.mxu0 %v598
      %642 = vmatpush.bf16.msra.mxu0 %v595
      %643 = vmatpush.bf16.msra.mxu0 %v592
      %644 = vmatpush.bf16.msra.mxu0 %v589
      %645 = vmatpush.bf16.msra.mxu0 %v586
      %646 = vmatpush.bf16.msra.mxu0 %v583
      %647 = vmatpush.bf16.msra.mxu0 %v580
      %648 = vmatmul.bf16.gmra.mxu0 %v490
      %v649 = vpop.f32.mrf.mxu0
      %v650 = vadd.f32 %v494, %v649
      %v651 = vpop.f32.mrf.mxu0
      %652 = vdwg.mxu0
      %653 = vmatpush.bf16.msra.mxu0 %v602
      %654 = vmatpush.bf16.msra.mxu0 %v599
      %655 = vmatpush.bf16.msra.mxu0 %v596
      %656 = vmatpush.bf16.msra.mxu0 %v593
      %657 = vmatpush.bf16.msra.mxu0 %v590
      %658 = vmatpush.bf16.msra.mxu0 %v587
      %659 = vmatpush.bf16.msra.mxu0 %v584
      %660 = vmatpush.bf16.msra.mxu0 %v581
      %661 = vmatmul.bf16.gmra.mxu0 %v490
      %v662 = vpop.f32.mrf.mxu0
      %v663 = vadd.f32 %v495, %v662
      %v664 = vpop.f32.mrf.mxu0
      %665 = vdwg.mxu0
      %v666 = vadd.f32 %v461, %v637
      %v667 = vxor.u32 %v666, 2147483648
      %v668 = vmul.f32 %v667, 1.442695
      %v669 = vpow.pop %v668
      %v670 = vadd.f32 %v669, 1.0
      %v671 = vrcp.pop %v670
      %v672 = vmul.f32 %v670, %v671
      %v673 = vsub.f32 1.0, %v672
      %v674 = vmul.f32 %v671, %v673
      %v675 = vadd.f32 %v671, %v674
      %vm676 = vweird.f32 %v670
      %vm677 = vweird.f32 %v671
      %vm678 = vmor %vm676, %vm677
      %v679 = vsel %vm678, %v671, %v675
      %v680 = vand.u32 2147483647, %v670
      %vm681 = vcmp.eq.f32.partialorder %v680, 8.507059e+37
      %v682 = vand.u32 %v670, 2147483648
      %v683 = vor.u32 1.1754944e-38, %v682
      %v684 = vsel %vm681, %v683, %v679
      %v685 = vmul.f32 1.0, %v684
      %v686 = vadd.f32 %v474, %v650
      %v687 = vxor.u32 %v686, 2147483648
      %v688 = vmul.f32 %v687, 1.442695
      %v689 = vpow.pop %v688
      %v690 = vadd.f32 %v689, 1.0
      %v691 = vrcp.pop %v690
      %v692 = vmul.f32 %v690, %v691
      %v693 = vsub.f32 1.0, %v692
      %v694 = vmul.f32 %v691, %v693
      %v695 = vadd.f32 %v691, %v694
      %vm696 = vweird.f32 %v690
      %vm697 = vweird.f32 %v691
      %vm698 = vmor %vm696, %vm697
      %v699 = vsel %vm698, %v691, %v695
      %v700 = vand.u32 2147483647, %v690
      %vm701 = vcmp.eq.f32.partialorder %v700, 8.507059e+37
      %v702 = vand.u32 %v690, 2147483648
      %v703 = vor.u32 1.1754944e-38, %v702
      %v704 = vsel %vm701, %v703, %v699
      %v705 = vmul.f32 1.0, %v704
      %v706 = vmul.f32 %v685, %v663
      %v707 = vadd.f32 %v487, %v706
      %v708 = vtanh.pop %v707
      %v709 = vsub.f32 1.0, %v705
      %v710 = vmul.f32 %v709, %v708
      %v711 = vmul.f32 %v705, %v249
      %v712 = vadd.f32 %v710, %v711
      %713 = vst [vmem:[%s242] sm:$0xff] %v712
      %p714 = scmp.lt.s32.totalorder %s20, 0
      %s715 = scalar_select %p714, %s20, 0
      %s716 = smul.addr %s715, 8
      %s717 = scalar_lea.vmem %s5, %s716
      // Predicated region
      $region45: #{base_model_forward.2} parent=39 // pred_check
        %p718 = pneg %p158
      $region46: #{base_model_forward.2} parent=39 // pred_check_branch
        %720 = sbr.rel (%p718) target = $region48
      $region47: #{base_model_forward.2} parent=39 // pred_region
        _
      $region48: #{base_model_forward.2} parent=39 // pred_fallthru
        _
      // Predicated region
      $region49: #{base_model_forward.2} parent=39 // pred_check
        %p721 = pneg %p158
      $region50: #{base_model_forward.2} parent=39 // pred_check_branch
        %723 = sbr.rel (%p721) target = $region52
      $region51: #{base_model_forward.2} parent=39 // pred_region
        %p724 = scmp.lt.s32.totalorder %s20, 0
        %s725 = scalar_select %p724, %s20, 0
        %s726 = smul.addr %s725, 8
        %s727 = scalar_lea.vmem %s5, %s726
      $region52: #{base_model_forward.2} parent=39 // pred_fallthru
        _
    $region40: #{base_model_forward.2} parent=5 // pred_fallthru
      _
    %p728 = scmp.le.s32.totalorder 2, %s11
    // Predicated region
    $region53: #{base_model_forward.2} parent=5 // pred_check
      %p729 = pneg %p728
    $region54: #{base_model_forward.2} parent=5 // pred_check_branch
      %731 = sbr.rel (%p729) target = $region56
    $region55: #{base_model_forward.2} parent=5 // pred_region
      %s732 = ssub.s32 %s11, 2
    $region56: #{base_model_forward.2} parent=5 // pred_fallthru
      _
  $region6: #{base_model_forward.2} parent=0 // loop_footer
    %s15 = sadd.s32 1, %s11
  $region7: #{base_model_forward.2} parent=0 // loop_footer_branch
    %10 = sbr.rel target = $region3
  $region8: #{base_model_forward.2} parent=0 // loop_exit
    _

// kernel: base_model_forward.3
$region0: #{base_model_forward.3}
  #allocation0 [shape = 'u32[]', space=smem, size = 0x4, offset = 0x4, fixed_abs, tag = 'smem constant byte address 0x4 - core index']
  #allocation1 [shape = 'u32[72,128]{1,0:T(1,128)}', space=vmem, size = 0x9000, scoped, tag = 'internal scratch']
  %s0 = inlined_call_operand.vmem [shape: f32[8,16,128], index: 0, kind: input, shape index: {}]
  %s1 = inlined_call_operand.vmem [shape: f32[8,128], index: 1, kind: input, shape index: {}]
  %s2 = inlined_call_operand.vmem [shape: bf16[128,128], index: 2, kind: input, shape index: {}]
  %s3 = inlined_call_operand.vmem [shape: f32[1,128], index: 3, kind: input, shape index: {}]
  %s4 = inlined_call_operand.vmem [shape: bf16[128,128], index: 4, kind: input, shape index: {}]
  %s5 = inlined_call_operand.vmem [shape: f32[1,128], index: 5, kind: input, shape index: {}]
  %s6 = inlined_call_operand.vmem [shape: f32[1,128], index: 6, kind: input, shape index: {}]
  %s7 = inlined_call_operand.vmem [shape: bf16[128,128], index: 7, kind: input, shape index: {}]
  %s8 = inlined_call_operand.vmem [shape: f32[1,128], index: 8, kind: input, shape index: {}]
  %s9 = inlined_call_operand.hbm [shape: bf16[128,128], index: 9, kind: input, shape index: {}]
  %s10 = inlined_call_operand.vmem [shape: f32[1,128], index: 10, kind: input, shape index: {}]
  %s11 = inlined_call_operand.hbm [shape: f32[8,128], index: 11, kind: output, shape index: {}]
  %s12 = sld [smem:[#allocation0]]
  $region58: #{base_model_forward.3} parent=0
    _
  %s14 = ssub.s32 1, %s12
  %s15 = scalar_select 0, %s14, %s12
  $region1: #{base_model_forward.3} parent=0
    #allocation2 [shape = 'u8[32768]{0}', space=vmem, size = 0x8000, scoped, tag = 'input window, operand 9, single buffered']
    #allocation3 [shape = 's32[1]{0}', space=sflag, size = 0x4, scoped, tag = 'scoped memory for base_model_forward.3']
    #allocation4 [shape = 's32[1]{0}', space=sflag, size = 0x4, scoped, tag = 'scoped memory for base_model_forward.3']
    #allocation5 [shape = 'u8[4096]{0}', space=vmem, size = 0x1000, scoped, tag = 'output window, operand 0, single buffered']
    %16 = vsyncpa [#allocation3], 0
    %17 = vsyncpa [#allocation4], 0
    // Predicated region
    $region2: #{base_model_forward.3} parent=1 // pred_check
      _
    $region3: #{base_model_forward.3} parent=1 // pred_check_branch
      %19 = sbr.rel (0) target = $region5
    $region4: #{base_model_forward.3} parent=1 // pred_region
      _
    $region5: #{base_model_forward.3} parent=1 // pred_fallthru
      _
    // Predicated region
    $region6: #{base_model_forward.3} parent=1 // pred_check
      _
    $region7: #{base_model_forward.3} parent=1 // pred_check_branch
      %21 = sbr.rel (0) target = $region9
    $region8: #{base_model_forward.3} parent=1 // pred_region
      _
    $region9: #{base_model_forward.3} parent=1 // pred_fallthru
      _
    // Predicated region
    $region10: #{base_model_forward.3} parent=1 // pred_check
      _
    $region11: #{base_model_forward.3} parent=1 // pred_check_branch
      %23 = sbr.rel (0) target = $region13
    $region12: #{base_model_forward.3} parent=1 // pred_region
      _
    $region13: #{base_model_forward.3} parent=1 // pred_fallthru
      _
    // Predicated region
    $region14: #{base_model_forward.3} parent=1 // pred_check
      _
    $region15: #{base_model_forward.3} parent=1 // pred_check_branch
      %25 = sbr.rel (0) target = $region17
    $region16: #{base_model_forward.3} parent=1 // pred_region
      _
    $region17: #{base_model_forward.3} parent=1 // pred_fallthru
      _
    // Predicated region
    $region18: #{base_model_forward.3} parent=1 // pred_check
      _
    $region19: #{base_model_forward.3} parent=1 // pred_check_branch
      %27 = sbr.rel (0) target = $region21
    $region20: #{base_model_forward.3} parent=1 // pred_region
      _
    $region21: #{base_model_forward.3} parent=1 // pred_fallthru
      _
    // Predicated region
    $region22: #{base_model_forward.3} parent=1 // pred_check
      _
    $region23: #{base_model_forward.3} parent=1 // pred_check_branch
      %29 = sbr.rel (0) target = $region25
    $region24: #{base_model_forward.3} parent=1 // pred_region
      _
    $region25: #{base_model_forward.3} parent=1 // pred_fallthru
      _
    // Predicated region
    $region26: #{base_model_forward.3} parent=1 // pred_check
      _
    $region27: #{base_model_forward.3} parent=1 // pred_check_branch
      %31 = sbr.rel (0) target = $region29
    $region28: #{base_model_forward.3} parent=1 // pred_region
      _
    $region29: #{base_model_forward.3} parent=1 // pred_fallthru
      _
    // Predicated region
    $region30: #{base_model_forward.3} parent=1 // pred_check
      _
    $region31: #{base_model_forward.3} parent=1 // pred_check_branch
      %33 = sbr.rel (0) target = $region33
    $region32: #{base_model_forward.3} parent=1 // pred_region
      _
    $region33: #{base_model_forward.3} parent=1 // pred_fallthru
      _
    // Predicated region
    $region34: #{base_model_forward.3} parent=1 // pred_check
      _
    $region35: #{base_model_forward.3} parent=1 // pred_check_branch
      %35 = sbr.rel (0) target = $region37
    $region36: #{base_model_forward.3} parent=1 // pred_region
      _
    $region37: #{base_model_forward.3} parent=1 // pred_fallthru
      _
    // Predicated region
    $region38: #{base_model_forward.3} parent=1 // pred_check
      _
    $region39: #{base_model_forward.3} parent=1 // pred_check_branch
      %37 = sbr.rel (0) target = $region41
    $region40: #{base_model_forward.3} parent=1 // pred_region
      %39 = vsyncadd [#allocation3], 0
      %s40 = sshll.u32 %s9, 4
      %s41 = int_to_ptr.hbm [resolvable:$true] %s40
      %s42 = sshll.u32 [#allocation2], 4
      %s43 = int_to_ptr.vmem [resolvable:$true] %s42
      %48 = dma.hbm_to_vmem [thread:$0]  %s41, 1024, %s43, [#allocation3], 64, 64, 4
    $region41: #{base_model_forward.3} parent=1 // pred_fallthru
      _
    // Predicated region
    $region42: #{base_model_forward.3} parent=1 // pred_check
      _
    $region43: #{base_model_forward.3} parent=1 // pred_check_branch
      %50 = sbr.rel (0) target = $region45
    $region44: #{base_model_forward.3} parent=1 // pred_region
      _
    $region45: #{base_model_forward.3} parent=1 // pred_fallthru
      _
    // Predicated region
    $region46: #{base_model_forward.3} parent=1 // pred_check
      _
    $region47: #{base_model_forward.3} parent=1 // pred_check_branch
      %52 = sbr.rel (0) target = $region49
    $region48: #{base_model_forward.3} parent=1 // pred_region
      %54 = dma.done [#allocation3], 1024
    $region49: #{base_model_forward.3} parent=1 // pred_fallthru
      _
    %v55 = vld [vmem:[%s0] sm:$0xff]
    %v56 = vld [vmem:[%s0 + $0x8] sm:$0xff]
    %v57 = vld [vmem:[%s0 + $0x10] sm:$0xff]
    %v58 = vld [vmem:[%s0 + $0x18] sm:$0xff]
    %v59 = vld [vmem:[%s0 + $0x20] sm:$0xff]
    %v60 = vld [vmem:[%s0 + $0x28] sm:$0xff]
    %v61 = vld [vmem:[%s0 + $0x30] sm:$0xff]
    %v62 = vld [vmem:[%s0 + $0x38] sm:$0xff]
    %v63 = vld [vmem:[%s0 + $0x40] sm:$0xff]
    %v64 = vld [vmem:[%s0 + $0x48] sm:$0xff]
    %v65 = vld [vmem:[%s0 + $0x50] sm:$0xff]
    %v66 = vld [vmem:[%s0 + $0x58] sm:$0xff]
    %v67 = vld [vmem:[%s0 + $0x60] sm:$0xff]
    %v68 = vld [vmem:[%s0 + $0x68] sm:$0xff]
    %v69 = vld [vmem:[%s0 + $0x70] sm:$0xff]
    %v70 = vld [vmem:[%s0 + $0x78] sm:$0xff]
    %v71 = vld [vmem:[%s1] sm:$0xff]
    %v72 = vld [vmem:[%s2] sm:$0xf]
    %v73 = vld [vmem:[%s2 + $0x4] sm:$0xf]
    %v74 = vld [vmem:[%s2 + $0x8] sm:$0xf]
    %v75 = vld [vmem:[%s2 + $0xc] sm:$0xf]
    %v76 = vld [vmem:[%s2 + $0x10] sm:$0xf]
    %v77 = vld [vmem:[%s2 + $0x14] sm:$0xf]
    %v78 = vld [vmem:[%s2 + $0x18] sm:$0xf]
    %v79 = vld [vmem:[%s2 + $0x1c] sm:$0xf]
    %v80 = vld [vmem:[%s2 + $0x20] sm:$0xf]
    %v81 = vld [vmem:[%s2 + $0x24] sm:$0xf]
    %v82 = vld [vmem:[%s2 + $0x28] sm:$0xf]
    %v83 = vld [vmem:[%s2 + $0x2c] sm:$0xf]
    %v84 = vld [vmem:[%s2 + $0x30] sm:$0xf]
    %v85 = vld [vmem:[%s2 + $0x34] sm:$0xf]
    %v86 = vld [vmem:[%s2 + $0x38] sm:$0xf]
    %v87 = vld [vmem:[%s2 + $0x3c] sm:$0xf]
    %v88 = vld [vmem:[%s4] sm:$0xf]
    %v89 = vld [vmem:[%s4 + $0x4] sm:$0xf]
    %v90 = vld [vmem:[%s4 + $0x8] sm:$0xf]
    %v91 = vld [vmem:[%s4 + $0xc] sm:$0xf]
    %v92 = vld [vmem:[%s4 + $0x10] sm:$0xf]
    %v93 = vld [vmem:[%s4 + $0x14] sm:$0xf]
    %v94 = vld [vmem:[%s4 + $0x18] sm:$0xf]
    %v95 = vld [vmem:[%s4 + $0x1c] sm:$0xf]
    %v96 = vld [vmem:[%s4 + $0x20] sm:$0xf]
    %v97 = vld [vmem:[%s4 + $0x24] sm:$0xf]
    %v98 = vld [vmem:[%s4 + $0x28] sm:$0xf]
    %v99 = vld [vmem:[%s4 + $0x2c] sm:$0xf]
    %v100 = vld [vmem:[%s4 + $0x30] sm:$0xf]
    %v101 = vld [vmem:[%s4 + $0x34] sm:$0xf]
    %v102 = vld [vmem:[%s4 + $0x38] sm:$0xf]
    %v103 = vld [vmem:[%s4 + $0x3c] sm:$0xf]
    %v104 = vpack.c.bf16 %v56, %v55
    %v105 = vpack.c.bf16 %v58, %v57
    %v106 = vpack.c.bf16 %v60, %v59
    %v107 = vpack.c.bf16 %v62, %v61
    %v108 = vpack.c.bf16 %v64, %v63
    %v109 = vpack.c.bf16 %v66, %v65
    %v110 = vpack.c.bf16 %v68, %v67
    %v111 = vpack.c.bf16 %v70, %v69
    %v112 = vld [vmem:[%s3] sm:$0x1]
    %v114 = vperm.slane %v112, 0
    %v132 = vunpack.c.l.b16 %v72
    %v133 = vunpack.c.l.b16 %v73
    %v134 = vunpack.c.l.b16 %v74
    %v135 = vunpack.c.l.b16 %v75
    %v136 = vunpack.c.l.b16 %v76
    %v137 = vunpack.c.l.b16 %v77
    %v138 = vunpack.c.l.b16 %v78
    %v139 = vunpack.c.l.b16 %v79
    %v140 = vunpack.c.l.b16 %v80
    %v141 = vunpack.c.l.b16 %v81
    %v142 = vunpack.c.l.b16 %v82
    %v143 = vunpack.c.l.b16 %v83
    %v144 = vunpack.c.l.b16 %v84
    %v145 = vunpack.c.l.b16 %v85
    %v146 = vunpack.c.l.b16 %v86
    %v147 = vunpack.c.l.b16 %v87
    %v148 = vpack.c.b16 %v133, %v132
    %v149 = vpack.c.b16 %v135, %v134
    %v150 = vpack.c.b16 %v137, %v136
    %v151 = vpack.c.b16 %v139, %v138
    %v152 = vpack.c.b16 %v141, %v140
    %v153 = vpack.c.b16 %v143, %v142
    %v154 = vpack.c.b16 %v145, %v144
    %v155 = vpack.c.b16 %v147, %v146
    %164 = vmatpush.bf16.msra.mxu0 %v155
    %165 = vmatpush.bf16.msra.mxu0 %v154
    %166 = vmatpush.bf16.msra.mxu0 %v153
    %167 = vmatpush.bf16.msra.mxu0 %v152
    %168 = vmatpush.bf16.msra.mxu0 %v151
    %169 = vmatpush.bf16.msra.mxu0 %v150
    %170 = vmatpush.bf16.msra.mxu0 %v149
    %171 = vmatpush.bf16.msra.mxu0 %v148
    %172 = vmatmul.bf16.gmra.mxu0 %v104
    %v173 = vpop.f32.mrf.mxu0
    %v174 = vadd.f32 %v114, %v173
    %v175 = vpop.f32.mrf.mxu0
    %v176 = vadd.f32 %v114, %v175
    %177 = vmatmul.bf16.gmra.mxu0 %v105
    %v178 = vpop.f32.mrf.mxu0
    %v179 = vadd.f32 %v114, %v178
    %v180 = vpop.f32.mrf.mxu0
    %v181 = vadd.f32 %v114, %v180
    %182 = vmatmul.bf16.gmra.mxu0 %v106
    %v183 = vpop.f32.mrf.mxu0
    %v184 = vadd.f32 %v114, %v183
    %v185 = vpop.f32.mrf.mxu0
    %v186 = vadd.f32 %v114, %v185
    %187 = vmatmul.bf16.gmra.mxu0 %v107
    %v188 = vpop.f32.mrf.mxu0
    %v189 = vadd.f32 %v114, %v188
    %v190 = vpop.f32.mrf.mxu0
    %v191 = vadd.f32 %v114, %v190
    %192 = vmatmul.bf16.gmra.mxu0 %v108
    %v193 = vpop.f32.mrf.mxu0
    %v194 = vadd.f32 %v114, %v193
    %v195 = vpop.f32.mrf.mxu0
    %v196 = vadd.f32 %v114, %v195
    %197 = vmatmul.bf16.gmra.mxu0 %v109
    %v198 = vpop.f32.mrf.mxu0
    %v199 = vadd.f32 %v114, %v198
    %v200 = vpop.f32.mrf.mxu0
    %v201 = vadd.f32 %v114, %v200
    %202 = vmatmul.bf16.gmra.mxu0 %v110
    %v203 = vpop.f32.mrf.mxu0
    %v204 = vadd.f32 %v114, %v203
    %v205 = vpop.f32.mrf.mxu0
    %v206 = vadd.f32 %v114, %v205
    %207 = vmatmul.bf16.gmra.mxu0 %v111
    %v208 = vpop.f32.mrf.mxu0
    %v209 = vadd.f32 %v114, %v208
    %v210 = vpop.f32.mrf.mxu0
    %v211 = vadd.f32 %v114, %v210
    %212 = vdwg.mxu0
    %v213 = vmax.f32 %v174, 0.0
    %v214 = vmax.f32 %v176, 0.0
    %v215 = vmax.f32 %v179, 0.0
    %v216 = vmax.f32 %v181, 0.0
    %v217 = vmax.f32 %v184, 0.0
    %v218 = vmax.f32 %v186, 0.0
    %v219 = vmax.f32 %v189, 0.0
    %v220 = vmax.f32 %v191, 0.0
    %v221 = vmax.f32 %v194, 0.0
    %v222 = vmax.f32 %v196, 0.0
    %v223 = vmax.f32 %v199, 0.0
    %v224 = vmax.f32 %v201, 0.0
    %v225 = vmax.f32 %v204, 0.0
    %v226 = vmax.f32 %v206, 0.0
    %v227 = vmax.f32 %v209, 0.0
    %v228 = vmax.f32 %v211, 0.0
    %v229 = vpack.c.bf16 %v71, %v71
    %v230 = vld [vmem:[%s5] sm:$0x1]
    %v232 = vperm.slane %v230, 0
    %v250 = vunpack.c.l.b16 %v88
    %v251 = vunpack.c.l.b16 %v89
    %v252 = vunpack.c.l.b16 %v90
    %v253 = vunpack.c.l.b16 %v91
    %v254 = vunpack.c.l.b16 %v92
    %v255 = vunpack.c.l.b16 %v93
    %v256 = vunpack.c.l.b16 %v94
    %v257 = vunpack.c.l.b16 %v95
    %v258 = vunpack.c.l.b16 %v96
    %v259 = vunpack.c.l.b16 %v97
    %v260 = vunpack.c.l.b16 %v98
    %v261 = vunpack.c.l.b16 %v99
    %v262 = vunpack.c.l.b16 %v100
    %v263 = vunpack.c.l.b16 %v101
    %v264 = vunpack.c.l.b16 %v102
    %v265 = vunpack.c.l.b16 %v103
    %v266 = vpack.c.b16 %v251, %v250
    %v267 = vpack.c.b16 %v253, %v252
    %v268 = vpack.c.b16 %v255, %v254
    %v269 = vpack.c.b16 %v257, %v256
    %v270 = vpack.c.b16 %v259, %v258
    %v271 = vpack.c.b16 %v261, %v260
    %v272 = vpack.c.b16 %v263, %v262
    %v273 = vpack.c.b16 %v265, %v264
    %282 = vmatpush.bf16.msra.mxu0 %v273
    %283 = vmatpush.bf16.msra.mxu0 %v272
    %284 = vmatpush.bf16.msra.mxu0 %v271
    %285 = vmatpush.bf16.msra.mxu0 %v270
    %286 = vmatpush.bf16.msra.mxu0 %v269
    %287 = vmatpush.bf16.msra.mxu0 %v268
    %288 = vmatpush.bf16.msra.mxu0 %v267
    %289 = vmatpush.bf16.msra.mxu0 %v266
    %290 = vmatmul.bf16.gmra.mxu0 %v229
    %v291 = vpop.f32.mrf.mxu0
    %v292 = vadd.f32 %v232, %v291
    %v293 = vpop.f32.mrf.mxu0
    %294 = vdwg.mxu0
    %v295 = vmax.f32 %v292, 0.0
    %v296 = vld [vmem:[%s6] sm:$0x1]
    %v298 = vperm.slane %v296, 0
    %v300 = vmul.f32 %v295, %v298
    %v302 = vrot.slane %v300, 1
    %v303 = vrot.slane %v300, 2
    %v304 = vrot.slane %v300, 3
    %v305 = vrot.slane %v300, 4
    %v306 = vrot.slane %v300, 5
    %v307 = vrot.slane %v300, 6
    %v308 = vrot.slane %v300, 7
    %v309 = vperm.slane %v300, 0
    %v310 = vperm.slane %v302, 0
    %v311 = vperm.slane %v303, 0
    %v312 = vperm.slane %v304, 0
    %v313 = vperm.slane %v305, 0
    %v314 = vperm.slane %v306, 0
    %v315 = vperm.slane %v307, 0
    %v316 = vperm.slane %v308, 0
    %v325 = vmul.f32 %v213, %v309
    %v326 = vmul.f32 %v214, %v309
    %v327 = vmul.f32 %v215, %v310
    %v328 = vmul.f32 %v216, %v310
    %v329 = vmul.f32 %v217, %v311
    %v330 = vmul.f32 %v218, %v311
    %v331 = vmul.f32 %v219, %v312
    %v332 = vmul.f32 %v220, %v312
    %v333 = vmul.f32 %v221, %v313
    %v334 = vmul.f32 %v222, %v313
    %v335 = vmul.f32 %v223, %v314
    %v336 = vmul.f32 %v224, %v314
    %v337 = vmul.f32 %v225, %v315
    %v338 = vmul.f32 %v226, %v315
    %v339 = vmul.f32 %v227, %v316
    %v340 = vmul.f32 %v228, %v316
    %341 = vadd.xlane.f32.xlu0 %v325
    %v342 = vpop.xlane.xlu0 %341
    %343 = vadd.xlane.f32.xlu0 %v326
    %v344 = vpop.xlane.xlu0 %343
    %345 = vadd.xlane.f32.xlu0 %v327
    %v346 = vpop.xlane.xlu0 %345
    %347 = vadd.xlane.f32.xlu0 %v328
    %v348 = vpop.xlane.xlu0 %347
    %349 = vadd.xlane.f32.xlu0 %v329
    %v350 = vpop.xlane.xlu0 %349
    %351 = vadd.xlane.f32.xlu0 %v330
    %v352 = vpop.xlane.xlu0 %351
    %353 = vadd.xlane.f32.xlu0 %v331
    %v354 = vpop.xlane.xlu0 %353
    %355 = vadd.xlane.f32.xlu0 %v332
    %v356 = vpop.xlane.xlu0 %355
    %357 = vadd.xlane.f32.xlu0 %v333
    %v358 = vpop.xlane.xlu0 %357
    %359 = vadd.xlane.f32.xlu0 %v334
    %v360 = vpop.xlane.xlu0 %359
    %361 = vadd.xlane.f32.xlu0 %v335
    %v362 = vpop.xlane.xlu0 %361
    %363 = vadd.xlane.f32.xlu0 %v336
    %v364 = vpop.xlane.xlu0 %363
    %365 = vadd.xlane.f32.xlu0 %v337
    %v366 = vpop.xlane.xlu0 %365
    %367 = vadd.xlane.f32.xlu0 %v338
    %v368 = vpop.xlane.xlu0 %367
    %369 = vadd.xlane.f32.xlu0 %v339
    %v370 = vpop.xlane.xlu0 %369
    %371 = vadd.xlane.f32.xlu0 %v340
    %v372 = vpop.xlane.xlu0 %371
    %v389 = vlaneseq
    %v390 = vand.u32 %v389, 127
    %v391 = vperm.slane %v342, %v390
    %v392 = vadd.s32 %v390, 4294967288
    %v393 = vperm.slane %v344, %v392
    %vm394 = vcmask 130112
    %v395 = vsel %vm394, %v393, %v391
    %v396 = vperm.slane %v346, %v390
    %v397 = vperm.slane %v348, %v392
    %v398 = vsel %vm394, %v397, %v396
    %v399 = vperm.slane %v350, %v390
    %v400 = vperm.slane %v352, %v392
    %v401 = vsel %vm394, %v400, %v399
    %v402 = vperm.slane %v354, %v390
    %v403 = vperm.slane %v356, %v392
    %v404 = vsel %vm394, %v403, %v402
    %v405 = vperm.slane %v358, %v390
    %v406 = vperm.slane %v360, %v392
    %v407 = vsel %vm394, %v406, %v405
    %v408 = vperm.slane %v362, %v390
    %v409 = vperm.slane %v364, %v392
    %v410 = vsel %vm394, %v409, %v408
    %v411 = vperm.slane %v366, %v390
    %v412 = vperm.slane %v368, %v392
    %v413 = vsel %vm394, %v412, %v411
    %v414 = vperm.slane %v370, %v390
    %v415 = vperm.slane %v372, %v392
    %v416 = vsel %vm394, %v415, %v414
    %vm417 = vcmask 1041409
    %v418 = vsel %vm417, %v398, %v395
    %vm419 = vcmask 1042434
    %v420 = vsel %vm419, %v401, %v418
    %vm421 = vcmask 1043459
    %v422 = vsel %vm421, %v404, %v420
    %vm423 = vcmask 1044484
    %v424 = vsel %vm423, %v407, %v422
    %vm425 = vcmask 1045509
    %v426 = vsel %vm425, %v410, %v424
    %vm427 = vcmask 1046534
    %v428 = vsel %vm427, %v413, %v426
    %vm429 = vcmask 1047559
    %v430 = vsel %vm429, %v416, %v428
    %vm432 = vcmask 130048
    %v433 = vsel %vm432, %v430, -inf
    %434 = vmax.xlane.f32.xlu0 %v433
    %v435 = vpop.xlane.xlu0 %434
    %v437 = vperm.slane %v435, 0
    %v438 = vperm.slane %v435, 1
    %v439 = vperm.slane %v435, 2
    %v440 = vperm.slane %v435, 3
    %v441 = vperm.slane %v435, 4
    %v442 = vperm.slane %v435, 5
    %v443 = vperm.slane %v435, 6
    %v444 = vperm.slane %v435, 7
    %v453 = vsub.f32 %v342, %v437
    %v454 = vsub.f32 %v344, %v437
    %v455 = vsub.f32 %v346, %v438
    %v456 = vsub.f32 %v348, %v438
    %v457 = vsub.f32 %v350, %v439
    %v458 = vsub.f32 %v352, %v439
    %v459 = vsub.f32 %v354, %v440
    %v460 = vsub.f32 %v356, %v440
    %v461 = vsub.f32 %v358, %v441
    %v462 = vsub.f32 %v360, %v441
    %v463 = vsub.f32 %v362, %v442
    %v464 = vsub.f32 %v364, %v442
    %v465 = vsub.f32 %v366, %v443
    %v466 = vsub.f32 %v368, %v443
    %v467 = vsub.f32 %v370, %v444
    %v468 = vsub.f32 %v372, %v444
    %v469 = vmul.f32 %v453, 1.442695
    %v470 = vpow.pop %v469
    %v471 = vmul.f32 %v454, 1.442695
    %v472 = vpow.pop %v471
    %v473 = vmul.f32 %v455, 1.442695
    %v474 = vpow.pop %v473
    %v475 = vmul.f32 %v456, 1.442695
    %v476 = vpow.pop %v475
    %v477 = vmul.f32 %v457, 1.442695
    %v478 = vpow.pop %v477
    %v479 = vmul.f32 %v458, 1.442695
    %v480 = vpow.pop %v479
    %v481 = vmul.f32 %v459, 1.442695
    %v482 = vpow.pop %v481
    %v483 = vmul.f32 %v460, 1.442695
    %v484 = vpow.pop %v483
    %v485 = vmul.f32 %v461, 1.442695
    %v486 = vpow.pop %v485
    %v487 = vmul.f32 %v462, 1.442695
    %v488 = vpow.pop %v487
    %v489 = vmul.f32 %v463, 1.442695
    %v490 = vpow.pop %v489
    %v491 = vmul.f32 %v464, 1.442695
    %v492 = vpow.pop %v491
    %v493 = vmul.f32 %v465, 1.442695
    %v494 = vpow.pop %v493
    %v495 = vmul.f32 %v466, 1.442695
    %v496 = vpow.pop %v495
    %v497 = vmul.f32 %v467, 1.442695
    %v498 = vpow.pop %v497
    %v499 = vmul.f32 %v468, 1.442695
    %v500 = vpow.pop %v499
    %517 = vset.pattern.permute.xlu0 0
    %518 = vperm.xlu0 %517, %v470
    %v519 = vpop.permute.xlu0 %518
    %520 = vset.pattern.permute.xlu0 0
    %521 = vperm.xlu0 %520, %v472
    %v522 = vpop.permute.xlu0 %521
    %523 = vset.pattern.permute.xlu0 0
    %524 = vperm.xlu0 %523, %v474
    %v525 = vpop.permute.xlu0 %524
    %526 = vset.pattern.permute.xlu0 0
    %527 = vperm.xlu0 %526, %v476
    %v528 = vpop.permute.xlu0 %527
    %529 = vset.pattern.permute.xlu0 0
    %530 = vperm.xlu0 %529, %v478
    %v531 = vpop.permute.xlu0 %530
    %532 = vset.pattern.permute.xlu0 0
    %533 = vperm.xlu0 %532, %v480
    %v534 = vpop.permute.xlu0 %533
    %535 = vset.pattern.permute.xlu0 0
    %536 = vperm.xlu0 %535, %v482
    %v537 = vpop.permute.xlu0 %536
    %538 = vset.pattern.permute.xlu0 0
    %539 = vperm.xlu0 %538, %v484
    %v540 = vpop.permute.xlu0 %539
    %541 = vset.pattern.permute.xlu0 0
    %542 = vperm.xlu0 %541, %v486
    %v543 = vpop.permute.xlu0 %542
    %544 = vset.pattern.permute.xlu0 0
    %545 = vperm.xlu0 %544, %v488
    %v546 = vpop.permute.xlu0 %545
    %547 = vset.pattern.permute.xlu0 0
    %548 = vperm.xlu0 %547, %v490
    %v549 = vpop.permute.xlu0 %548
    %550 = vset.pattern.permute.xlu0 0
    %551 = vperm.xlu0 %550, %v492
    %v552 = vpop.permute.xlu0 %551
    %553 = vset.pattern.permute.xlu0 0
    %554 = vperm.xlu0 %553, %v494
    %v555 = vpop.permute.xlu0 %554
    %556 = vset.pattern.permute.xlu0 0
    %557 = vperm.xlu0 %556, %v496
    %v558 = vpop.permute.xlu0 %557
    %559 = vset.pattern.permute.xlu0 0
    %560 = vperm.xlu0 %559, %v498
    %v561 = vpop.permute.xlu0 %560
    %562 = vset.pattern.permute.xlu0 0
    %563 = vperm.xlu0 %562, %v500
    %v564 = vpop.permute.xlu0 %563
    %v565 = vperm.slane %v519, %v390
    %v566 = vperm.slane %v522, %v392
    %v567 = vsel %vm394, %v566, %v565
    %v568 = vperm.slane %v525, %v390
    %v569 = vperm.slane %v528, %v392
    %v570 = vsel %vm394, %v569, %v568
    %v571 = vperm.slane %v531, %v390
    %v572 = vperm.slane %v534, %v392
    %v573 = vsel %vm394, %v572, %v571
    %v574 = vperm.slane %v537, %v390
    %v575 = vperm.slane %v540, %v392
    %v576 = vsel %vm394, %v575, %v574
    %v577 = vperm.slane %v543, %v390
    %v578 = vperm.slane %v546, %v392
    %v579 = vsel %vm394, %v578, %v577
    %v580 = vperm.slane %v549, %v390
    %v581 = vperm.slane %v552, %v392
    %v582 = vsel %vm394, %v581, %v580
    %v583 = vperm.slane %v555, %v390
    %v584 = vperm.slane %v558, %v392
    %v585 = vsel %vm394, %v584, %v583
    %v586 = vperm.slane %v561, %v390
    %v587 = vperm.slane %v564, %v392
    %v588 = vsel %vm394, %v587, %v586
    %v589 = vsel %vm417, %v570, %v567
    %v590 = vsel %vm419, %v573, %v589
    %v591 = vsel %vm421, %v576, %v590
    %v592 = vsel %vm423, %v579, %v591
    %v593 = vsel %vm425, %v582, %v592
    %v594 = vsel %vm427, %v585, %v593
    %v595 = vsel %vm429, %v588, %v594
    %v597 = vsel %vm432, %v595, 0.0
    %598 = vadd.xlane.f32.xlu0 %v597
    %v599 = vpop.xlane.xlu0 %598
    %v601 = vperm.slane %v599, 0
    %v602 = vperm.slane %v599, 1
    %v603 = vperm.slane %v599, 2
    %v604 = vperm.slane %v599, 3
    %v605 = vperm.slane %v599, 4
    %v606 = vperm.slane %v599, 5
    %v607 = vperm.slane %v599, 6
    %v608 = vperm.slane %v599, 7
    %v617 = vrcp.pop %v601
    %v618 = vmul.f32 %v601, %v617
    %v619 = vsub.f32 1.0, %v618
    %v620 = vmul.f32 %v617, %v619
    %v621 = vadd.f32 %v617, %v620
    %vm622 = vweird.f32 %v601
    %vm623 = vweird.f32 %v617
    %vm624 = vmor %vm622, %vm623
    %v625 = vsel %vm624, %v617, %v621
    %v626 = vand.u32 2147483647, %v601
    %vm627 = vcmp.eq.f32.partialorder %v626, 8.507059e+37
    %v628 = vand.u32 %v601, 2147483648
    %v629 = vor.u32 1.1754944e-38, %v628
    %v630 = vsel %vm627, %v629, %v625
    %v631 = vmul.f32 %v470, %v630
    %v632 = vmul.f32 %v472, %v630
    %v633 = vrcp.pop %v602
    %v634 = vmul.f32 %v602, %v633
    %v635 = vsub.f32 1.0, %v634
    %v636 = vmul.f32 %v633, %v635
    %v637 = vadd.f32 %v633, %v636
    %vm638 = vweird.f32 %v602
    %vm639 = vweird.f32 %v633
    %vm640 = vmor %vm638, %vm639
    %v641 = vsel %vm640, %v633, %v637
    %v642 = vand.u32 2147483647, %v602
    %vm643 = vcmp.eq.f32.partialorder %v642, 8.507059e+37
    %v644 = vand.u32 %v602, 2147483648
    %v645 = vor.u32 1.1754944e-38, %v644
    %v646 = vsel %vm643, %v645, %v641
    %v647 = vmul.f32 %v474, %v646
    %v648 = vmul.f32 %v476, %v646
    %v649 = vrcp.pop %v603
    %v650 = vmul.f32 %v603, %v649
    %v651 = vsub.f32 1.0, %v650
    %v652 = vmul.f32 %v649, %v651
    %v653 = vadd.f32 %v649, %v652
    %vm654 = vweird.f32 %v603
    %vm655 = vweird.f32 %v649
    %vm656 = vmor %vm654, %vm655
    %v657 = vsel %vm656, %v649, %v653
    %v658 = vand.u32 2147483647, %v603
    %vm659 = vcmp.eq.f32.partialorder %v658, 8.507059e+37
    %v660 = vand.u32 %v603, 2147483648
    %v661 = vor.u32 1.1754944e-38, %v660
    %v662 = vsel %vm659, %v661, %v657
    %v663 = vmul.f32 %v478, %v662
    %v664 = vmul.f32 %v480, %v662
    %v665 = vrcp.pop %v604
    %v666 = vmul.f32 %v604, %v665
    %v667 = vsub.f32 1.0, %v666
    %v668 = vmul.f32 %v665, %v667
    %v669 = vadd.f32 %v665, %v668
    %vm670 = vweird.f32 %v604
    %vm671 = vweird.f32 %v665
    %vm672 = vmor %vm670, %vm671
    %v673 = vsel %vm672, %v665, %v669
    %v674 = vand.u32 2147483647, %v604
    %vm675 = vcmp.eq.f32.partialorder %v674, 8.507059e+37
    %v676 = vand.u32 %v604, 2147483648
    %v677 = vor.u32 1.1754944e-38, %v676
    %v678 = vsel %vm675, %v677, %v673
    %v679 = vmul.f32 %v482, %v678
    %v680 = vmul.f32 %v484, %v678
    %v681 = vrcp.pop %v605
    %v682 = vmul.f32 %v605, %v681
    %v683 = vsub.f32 1.0, %v682
    %v684 = vmul.f32 %v681, %v683
    %v685 = vadd.f32 %v681, %v684
    %vm686 = vweird.f32 %v605
    %vm687 = vweird.f32 %v681
    %vm688 = vmor %vm686, %vm687
    %v689 = vsel %vm688, %v681, %v685
    %v690 = vand.u32 2147483647, %v605
    %vm691 = vcmp.eq.f32.partialorder %v690, 8.507059e+37
    %v692 = vand.u32 %v605, 2147483648
    %v693 = vor.u32 1.1754944e-38, %v692
    %v694 = vsel %vm691, %v693, %v689
    %v695 = vmul.f32 %v486, %v694
    %v696 = vmul.f32 %v488, %v694
    %v697 = vrcp.pop %v606
    %v698 = vmul.f32 %v606, %v697
    %v699 = vsub.f32 1.0, %v698
    %v700 = vmul.f32 %v697, %v699
    %v701 = vadd.f32 %v697, %v700
    %vm702 = vweird.f32 %v606
    %vm703 = vweird.f32 %v697
    %vm704 = vmor %vm702, %vm703
    %v705 = vsel %vm704, %v697, %v701
    %v706 = vand.u32 2147483647, %v606
    %vm707 = vcmp.eq.f32.partialorder %v706, 8.507059e+37
    %v708 = vand.u32 %v606, 2147483648
    %v709 = vor.u32 1.1754944e-38, %v708
    %v710 = vsel %vm707, %v709, %v705
    %v711 = vmul.f32 %v490, %v710
    %v712 = vmul.f32 %v492, %v710
    %v713 = vrcp.pop %v607
    %v714 = vmul.f32 %v607, %v713
    %v715 = vsub.f32 1.0, %v714
    %v716 = vmul.f32 %v713, %v715
    %v717 = vadd.f32 %v713, %v716
    %vm718 = vweird.f32 %v607
    %vm719 = vweird.f32 %v713
    %vm720 = vmor %vm718, %vm719
    %v721 = vsel %vm720, %v713, %v717
    %v722 = vand.u32 2147483647, %v607
    %vm723 = vcmp.eq.f32.partialorder %v722, 8.507059e+37
    %v724 = vand.u32 %v607, 2147483648
    %v725 = vor.u32 1.1754944e-38, %v724
    %v726 = vsel %vm723, %v725, %v721
    %v727 = vmul.f32 %v494, %v726
    %v728 = vmul.f32 %v496, %v726
    %v729 = vrcp.pop %v608
    %v730 = vmul.f32 %v608, %v729
    %v731 = vsub.f32 1.0, %v730
    %v732 = vmul.f32 %v729, %v731
    %v733 = vadd.f32 %v729, %v732
    %vm734 = vweird.f32 %v608
    %vm735 = vweird.f32 %v729
    %vm736 = vmor %vm734, %vm735
    %v737 = vsel %vm736, %v729, %v733
    %v738 = vand.u32 2147483647, %v608
    %vm739 = vcmp.eq.f32.partialorder %v738, 8.507059e+37
    %v740 = vand.u32 %v608, 2147483648
    %v741 = vor.u32 1.1754944e-38, %v740
    %v742 = vsel %vm739, %v741, %v737
    %v743 = vmul.f32 %v498, %v742
    %v744 = vmul.f32 %v500, %v742
    %746 = vset.pattern.permute.xlu0 0
    %747 = vperm.xlu0 %746, %v631
    %v748 = vpop.permute.xlu0 %747
    %751 = vset.pattern.permute.xlu0 0
    %752 = vperm.xlu0 %751, %v632
    %v753 = vpop.permute.xlu0 %752
    %756 = vset.pattern.permute.xlu0 0
    %757 = vperm.xlu0 %756, %v647
    %v758 = vpop.permute.xlu0 %757
    %761 = vset.pattern.permute.xlu0 0
    %762 = vperm.xlu0 %761, %v648
    %v763 = vpop.permute.xlu0 %762
    %766 = vset.pattern.permute.xlu0 0
    %767 = vperm.xlu0 %766, %v663
    %v768 = vpop.permute.xlu0 %767
    %771 = vset.pattern.permute.xlu0 0
    %772 = vperm.xlu0 %771, %v664
    %v773 = vpop.permute.xlu0 %772
    %776 = vset.pattern.permute.xlu0 0
    %777 = vperm.xlu0 %776, %v679
    %v778 = vpop.permute.xlu0 %777
    %781 = vset.pattern.permute.xlu0 0
    %782 = vperm.xlu0 %781, %v680
    %v783 = vpop.permute.xlu0 %782
    %786 = vset.pattern.permute.xlu0 0
    %787 = vperm.xlu0 %786, %v695
    %v788 = vpop.permute.xlu0 %787
    %791 = vset.pattern.permute.xlu0 0
    %792 = vperm.xlu0 %791, %v696
    %v793 = vpop.permute.xlu0 %792
    %796 = vset.pattern.permute.xlu0 0
    %797 = vperm.xlu0 %796, %v711
    %v798 = vpop.permute.xlu0 %797
    %801 = vset.pattern.permute.xlu0 0
    %802 = vperm.xlu0 %801, %v712
    %v803 = vpop.permute.xlu0 %802
    %806 = vset.pattern.permute.xlu0 0
    %807 = vperm.xlu0 %806, %v727
    %v808 = vpop.permute.xlu0 %807
    %811 = vset.pattern.permute.xlu0 0
    %812 = vperm.xlu0 %811, %v728
    %v813 = vpop.permute.xlu0 %812
    %816 = vset.pattern.permute.xlu0 0
    %817 = vperm.xlu0 %816, %v743
    %v818 = vpop.permute.xlu0 %817
    %821 = vset.pattern.permute.xlu0 0
    %822 = vperm.xlu0 %821, %v744
    %v823 = vpop.permute.xlu0 %822
    %v825 = vmul.f32 %v748, %v55
    %v826 = vmul.f32 %v753, %v56
    %v827 = vmul.f32 %v758, %v57
    %v828 = vmul.f32 %v763, %v58
    %v829 = vmul.f32 %v768, %v59
    %v830 = vmul.f32 %v773, %v60
    %v831 = vmul.f32 %v778, %v61
    %v832 = vmul.f32 %v783, %v62
    %v833 = vmul.f32 %v788, %v63
    %v834 = vmul.f32 %v793, %v64
    %v835 = vmul.f32 %v798, %v65
    %v836 = vmul.f32 %v803, %v66
    %v837 = vmul.f32 %v808, %v67
    %v838 = vmul.f32 %v813, %v68
    %v839 = vmul.f32 %v818, %v69
    %v840 = vmul.f32 %v823, %v70
    %v841 = vadd.f32 %v825, %v826
    %v842 = vrot.slane %v841, 4
    %v843 = vadd.f32 %v841, %v842
    %v844 = vrot.slane %v843, 2
    %v845 = vadd.f32 %v843, %v844
    %v846 = vrot.slane %v845, 1
    %v847 = vadd.f32 %v845, %v846
    %v848 = vadd.f32 %v827, %v828
    %v849 = vrot.slane %v848, 4
    %v850 = vadd.f32 %v848, %v849
    %v851 = vrot.slane %v850, 2
    %v852 = vadd.f32 %v850, %v851
    %v853 = vrot.slane %v852, 1
    %v854 = vadd.f32 %v852, %v853
    %v855 = vadd.f32 %v829, %v830
    %v856 = vrot.slane %v855, 4
    %v857 = vadd.f32 %v855, %v856
    %v858 = vrot.slane %v857, 2
    %v859 = vadd.f32 %v857, %v858
    %v860 = vrot.slane %v859, 1
    %v861 = vadd.f32 %v859, %v860
    %v862 = vadd.f32 %v831, %v832
    %v863 = vrot.slane %v862, 4
    %v864 = vadd.f32 %v862, %v863
    %v865 = vrot.slane %v864, 2
    %v866 = vadd.f32 %v864, %v865
    %v867 = vrot.slane %v866, 1
    %v868 = vadd.f32 %v866, %v867
    %v869 = vadd.f32 %v833, %v834
    %v870 = vrot.slane %v869, 4
    %v871 = vadd.f32 %v869, %v870
    %v872 = vrot.slane %v871, 2
    %v873 = vadd.f32 %v871, %v872
    %v874 = vrot.slane %v873, 1
    %v875 = vadd.f32 %v873, %v874
    %v876 = vadd.f32 %v835, %v836
    %v877 = vrot.slane %v876, 4
    %v878 = vadd.f32 %v876, %v877
    %v879 = vrot.slane %v878, 2
    %v880 = vadd.f32 %v878, %v879
    %v881 = vrot.slane %v880, 1
    %v882 = vadd.f32 %v880, %v881
    %v883 = vadd.f32 %v837, %v838
    %v884 = vrot.slane %v883, 4
    %v885 = vadd.f32 %v883, %v884
    %v886 = vrot.slane %v885, 2
    %v887 = vadd.f32 %v885, %v886
    %v888 = vrot.slane %v887, 1
    %v889 = vadd.f32 %v887, %v888
    %v890 = vadd.f32 %v839, %v840
    %v891 = vrot.slane %v890, 4
    %v892 = vadd.f32 %v890, %v891
    %v893 = vrot.slane %v892, 2
    %v894 = vadd.f32 %v892, %v893
    %v895 = vrot.slane %v894, 1
    %v896 = vadd.f32 %v894, %v895
    %v897 = vld [vmem:[%s7] sm:$0xf]
    %v898 = vld [vmem:[%s7 + $0x4] sm:$0xf]
    %v899 = vld [vmem:[%s7 + $0x8] sm:$0xf]
    %v900 = vld [vmem:[%s7 + $0xc] sm:$0xf]
    %v901 = vld [vmem:[%s7 + $0x10] sm:$0xf]
    %v902 = vld [vmem:[%s7 + $0x14] sm:$0xf]
    %v903 = vld [vmem:[%s7 + $0x18] sm:$0xf]
    %v904 = vld [vmem:[%s7 + $0x1c] sm:$0xf]
    %v905 = vld [vmem:[%s7 + $0x20] sm:$0xf]
    %v906 = vld [vmem:[%s7 + $0x24] sm:$0xf]
    %v907 = vld [vmem:[%s7 + $0x28] sm:$0xf]
    %v908 = vld [vmem:[%s7 + $0x2c] sm:$0xf]
    %v909 = vld [vmem:[%s7 + $0x30] sm:$0xf]
    %v910 = vld [vmem:[%s7 + $0x34] sm:$0xf]
    %v911 = vld [vmem:[%s7 + $0x38] sm:$0xf]
    %v912 = vld [vmem:[%s7 + $0x3c] sm:$0xf]
    %v913 = vld [vmem:[#allocation2] sm:$0xf]
    %v914 = vld [vmem:[#allocation2 + $0x4] sm:$0xf]
    %v915 = vld [vmem:[#allocation2 + $0x8] sm:$0xf]
    %v916 = vld [vmem:[#allocation2 + $0xc] sm:$0xf]
    %v917 = vld [vmem:[#allocation2 + $0x10] sm:$0xf]
    %v918 = vld [vmem:[#allocation2 + $0x14] sm:$0xf]
    %v919 = vld [vmem:[#allocation2 + $0x18] sm:$0xf]
    %v920 = vld [vmem:[#allocation2 + $0x1c] sm:$0xf]
    %v921 = vld [vmem:[#allocation2 + $0x20] sm:$0xf]
    %v922 = vld [vmem:[#allocation2 + $0x24] sm:$0xf]
    %v923 = vld [vmem:[#allocation2 + $0x28] sm:$0xf]
    %v924 = vld [vmem:[#allocation2 + $0x2c] sm:$0xf]
    %v925 = vld [vmem:[#allocation2 + $0x30] sm:$0xf]
    %v926 = vld [vmem:[#allocation2 + $0x34] sm:$0xf]
    %v927 = vld [vmem:[#allocation2 + $0x38] sm:$0xf]
    %v928 = vld [vmem:[#allocation2 + $0x3c] sm:$0xf]
    %v929 = vld [vmem:[%s8] sm:$0x1]
    %v931 = vperm.slane %v929, 0
    %v949 = vunpack.c.l.b16 %v897
    %v950 = vunpack.c.l.b16 %v898
    %v951 = vunpack.c.l.b16 %v899
    %v952 = vunpack.c.l.b16 %v900
    %v953 = vunpack.c.l.b16 %v901
    %v954 = vunpack.c.l.b16 %v902
    %v955 = vunpack.c.l.b16 %v903
    %v956 = vunpack.c.l.b16 %v904
    %v957 = vunpack.c.l.b16 %v905
    %v958 = vunpack.c.l.b16 %v906
    %v959 = vunpack.c.l.b16 %v907
    %v960 = vunpack.c.l.b16 %v908
    %v961 = vunpack.c.l.b16 %v909
    %v962 = vunpack.c.l.b16 %v910
    %v963 = vunpack.c.l.b16 %v911
    %v964 = vunpack.c.l.b16 %v912
    %v965 = vpack.c.b16 %v950, %v949
    %v966 = vpack.c.b16 %v952, %v951
    %v967 = vpack.c.b16 %v954, %v953
    %v968 = vpack.c.b16 %v956, %v955
    %v969 = vpack.c.b16 %v958, %v957
    %v970 = vpack.c.b16 %v960, %v959
    %v971 = vpack.c.b16 %v962, %v961
    %v972 = vpack.c.b16 %v964, %v963
    %981 = vmatpush.bf16.msra.mxu0 %v972
    %982 = vmatpush.bf16.msra.mxu0 %v971
    %983 = vmatpush.bf16.msra.mxu0 %v970
    %984 = vmatpush.bf16.msra.mxu0 %v969
    %985 = vmatpush.bf16.msra.mxu0 %v968
    %986 = vmatpush.bf16.msra.mxu0 %v967
    %987 = vmatpush.bf16.msra.mxu0 %v966
    %988 = vmatpush.bf16.msra.mxu0 %v965
    %989 = vmatmul.bf16.gmra.mxu0 %v229
    %v990 = vpop.f32.mrf.mxu0
    %v991 = vadd.f32 %v931, %v990
    %v992 = vpop.f32.mrf.mxu0
    %993 = vdwg.mxu0
    %v994 = vmax.f32 %v991, 0.0
    %v995 = vpack.c.bf16 %v847, %v847
    %v996 = vpack.c.bf16 %v854, %v854
    %v997 = vpack.c.bf16 %v861, %v861
    %v998 = vpack.c.bf16 %v868, %v868
    %v999 = vpack.c.bf16 %v875, %v875
    %v1000 = vpack.c.bf16 %v882, %v882
    %v1001 = vpack.c.bf16 %v889, %v889
    %v1002 = vpack.c.bf16 %v896, %v896
    %v1003 = vld [vmem:[%s10] sm:$0x1]
    %v1005 = vperm.slane %v1003, 0
    %v1015 = vunpack.c.l.b16 %v995
    %v1016 = vunpack.c.l.b16 %v996
    %v1017 = vunpack.c.l.b16 %v997
    %v1018 = vunpack.c.l.b16 %v998
    %v1019 = vunpack.c.l.b16 %v999
    %v1020 = vunpack.c.l.b16 %v1000
    %v1021 = vunpack.c.l.b16 %v1001
    %v1022 = vunpack.c.l.b16 %v1002
    %v1023 = vsel %vm417, %v1016, %v1015
    %v1024 = vsel %vm419, %v1017, %v1023
    %v1025 = vsel %vm421, %v1018, %v1024
    %v1026 = vsel %vm423, %v1019, %v1025
    %v1027 = vsel %vm425, %v1020, %v1026
    %v1028 = vsel %vm427, %v1021, %v1027
    %v1029 = vsel %vm429, %v1022, %v1028
    %v1030 = vpack.c.b16 %v1029, %v1029
    %v1048 = vunpack.c.l.b16 %v913
    %v1049 = vunpack.c.l.b16 %v914
    %v1050 = vunpack.c.l.b16 %v915
    %v1051 = vunpack.c.l.b16 %v916
    %v1052 = vunpack.c.l.b16 %v917
    %v1053 = vunpack.c.l.b16 %v918
    %v1054 = vunpack.c.l.b16 %v919
    %v1055 = vunpack.c.l.b16 %v920
    %v1056 = vunpack.c.l.b16 %v921
    %v1057 = vunpack.c.l.b16 %v922
    %v1058 = vunpack.c.l.b16 %v923
    %v1059 = vunpack.c.l.b16 %v924
    %v1060 = vunpack.c.l.b16 %v925
    %v1061 = vunpack.c.l.b16 %v926
    %v1062 = vunpack.c.l.b16 %v927
    %v1063 = vunpack.c.l.b16 %v928
    %v1064 = vpack.c.b16 %v1049, %v1048
    %v1065 = vpack.c.b16 %v1051, %v1050
    %v1066 = vpack.c.b16 %v1053, %v1052
    %v1067 = vpack.c.b16 %v1055, %v1054
    %v1068 = vpack.c.b16 %v1057, %v1056
    %v1069 = vpack.c.b16 %v1059, %v1058
    %v1070 = vpack.c.b16 %v1061, %v1060
    %v1071 = vpack.c.b16 %v1063, %v1062
    %1080 = vmatpush.bf16.msra.mxu0 %v1071
    %1081 = vmatpush.bf16.msra.mxu0 %v1070
    %1082 = vmatpush.bf16.msra.mxu0 %v1069
    %1083 = vmatpush.bf16.msra.mxu0 %v1068
    %1084 = vmatpush.bf16.msra.mxu0 %v1067
    %1085 = vmatpush.bf16.msra.mxu0 %v1066
    %1086 = vmatpush.bf16.msra.mxu0 %v1065
    %1087 = vmatpush.bf16.msra.mxu0 %v1064
    %1088 = vmatmul.bf16.gmra.mxu0 %v1030
    %v1089 = vpop.f32.mrf.mxu0
    %v1090 = vadd.f32 %v1005, %v1089
    %v1091 = vpop.f32.mrf.mxu0
    %1092 = vdwg.mxu0
    %v1093 = vmax.f32 %v1090, 0.0
    %v1094 = vmul.f32 %v994, %v1093
    %1095 = vst [vmem:[#allocation5] sm:$0xff] %v1094
    // Predicated region
    $region50: #{base_model_forward.3} parent=1 // pred_check
      _
    $region51: #{base_model_forward.3} parent=1 // pred_check_branch
      %1097 = sbr.rel (0) target = $region53
    $region52: #{base_model_forward.3} parent=1 // pred_region
      %1099 = vsyncadd [#allocation4], 0
      %s1101 = sshll.u32 [#allocation5], 4
      %s1102 = int_to_ptr.vmem [resolvable:$true] %s1101
      %s1103 = sshll.u32 %s11, 4
      %s1104 = int_to_ptr.hbm [resolvable:$true] %s1103
      %1106 = dma.vmem_to_hbm [thread:$0]  %s1102, 128, %s1104, [#allocation4]
    $region53: #{base_model_forward.3} parent=1 // pred_fallthru
      _
    // Predicated region
    $region54: #{base_model_forward.3} parent=1 // pred_check
      _
    $region55: #{base_model_forward.3} parent=1 // pred_check_branch
      %1108 = sbr.rel (0) target = $region57
    $region56: #{base_model_forward.3} parent=1 // pred_region
      %1110 = dma.done [#allocation4], 128
    $region57: #{base_model_forward.3} parent=1 // pred_fallthru
      _
    %1111 = vsyncpa [#allocation3], 1
    %1112 = vsyncpa [#allocation4], 1

</llo_original>
